<compile_context>
chip_gen: v6e
topology: v6e:2x2x1
jax: 0.10.0
libtpu: 0.0.40
codegen_flags: <defaults>
</compile_context>

<pallas_src>
import functools

import jax
import jax.numpy as jnp
from jax import lax
from jax.experimental import pallas as pl
from jax.experimental.pallas import tpu as pltpu

LANE = 128
MAX_BLOCK_ROWS = 8192            # (8192, 128) f32 block = 4 MiB
MIN_GRID_STEPS = 4               # lets v7x shard the 1-D grid across both TCs
VMEM_LIMIT_BYTES = 48 * 1024 * 1024   # fits v5e/v6e (128 MiB) and v7x (64 MiB)


def _round_up(v, m):
    return ((v + m - 1) // m) * m


def _cdiv(a, b):
    return -(-a // b)


# ----------------------------------------------------------------------------
# Kernels
# ----------------------------------------------------------------------------
def _lookup_gather_kernel(params_ref, x_ref, tab_ref, o_ref, *, table_len,
                          num_chunks):
    # params_ref: SMEM (2,)                 -> [idx_scale, input_min]
    # x_ref     : VMEM (block_rows, 128)    -> input block (native dtype)
    # tab_ref   : VMEM (num_chunks, 128)    -> table, padded to 128-lane chunks
    # o_ref     : VMEM (block_rows, 128)    -> f32 output block
    scale = params_ref[0]
    xmin = params_ref[1]
    idx_max = table_len - 1

    x = x_ref[...].astype(jnp.float32)
    # Clamp in float BEFORE the int cast (no int32 overflow for wild finite
    # inputs), then re-clamp the int so NaNs / garbage partial-block rows can
    # never produce an out-of-bounds lane index for the gather below.
    f = jnp.clip(scale * (x - xmin), 0.0, float(idx_max))
    idx = jnp.clip(f.astype(jnp.int32), 0, idx_max)

    if num_chunks == 1:
        # Hardware lane gather: out[i, j] = table[idx[i, j]].
        tab = jnp.broadcast_to(tab_ref[0:1, :], x.shape)
        o_ref[...] = jnp.take_along_axis(
            tab, idx, axis=1, mode="promise_in_bounds")
    else:
        # Chunked multi-vreg gather for tables with > 128 entries.
        idx_hi = idx >> 7                 # which 128-entry chunk
        idx_lo = idx & (LANE - 1)         # lane within the chunk
        out = jnp.zeros(x.shape, jnp.float32)
        for c in range(num_chunks):       # static unroll, num_chunks is small
            tab = jnp.broadcast_to(tab_ref[c:c + 1, :], x.shape)
            vals = jnp.take_along_axis(
                tab, idx_lo, axis=1, mode="promise_in_bounds")
            out = jnp.where(idx_hi == c, vals, out)
        o_ref[...] = out


def _lookup_scan_kernel(params_ref, table_ref, x_ref, o_ref, *, table_len):
    # Fallback path (only if the lane gather does not lower): unrolled
    # select-scan over the SMEM-resident table.
    scale = params_ref[0]
    xmin = params_ref[1]
    idx_max = table_len - 1
    x = x_ref[...].astype(jnp.float32)
    f = jnp.clip(scale * (x - xmin), 0.0, float(idx_max))
    idx = jnp.clip(f.astype(jnp.int32), 0, idx_max)
    out0 = jnp.zeros(x.shape, dtype=o_ref.dtype)

    def body(t, out):
        return jnp.where(idx == t, table_ref[t], out)

    unroll = True if table_len <= 256 else 8
    o_ref[...] = lax.fori_loop(0, table_len, body, out0, unroll=unroll)


# ----------------------------------------------------------------------------
# pallas_call builders
# ----------------------------------------------------------------------------
def _call_gather(x2d, params, tab_chunks, block_rows, table_len):
    rows = x2d.shape[0]
    num_chunks = int(tab_chunks.shape[0])
    n_elems = rows * LANE
    cost = pl.CostEstimate(
        flops=8 * n_elems,
        transcendentals=0,
        bytes_accessed=int(x2d.size * x2d.dtype.itemsize + n_elems * 4),
    )
    return pl.pallas_call(
        functools.partial(_lookup_gather_kernel, table_len=table_len,
                          num_chunks=num_chunks),
        out_shape=jax.ShapeDtypeStruct((rows, LANE), jnp.float32),
        grid_spec=pltpu.PrefetchScalarGridSpec(
            num_scalar_prefetch=1,                      # params -> SMEM
            grid=(pl.cdiv(rows, block_rows),),
            in_specs=[
                pl.BlockSpec((block_rows, LANE), lambda i, p: (i, 0)),
                # Table: one tiny block, constant index_map -> resident, no
                # per-step HBM traffic and no dependence on block_rows.
                pl.BlockSpec((num_chunks, LANE), lambda i, p: (0, 0)),
            ],
            out_specs=pl.BlockSpec((block_rows, LANE), lambda i, p: (i, 0)),
        ),
        compiler_params=pltpu.CompilerParams(
            dimension_semantics=("parallel",),
            vmem_limit_bytes=VMEM_LIMIT_BYTES,
        ),
        cost_estimate=cost,
    )(params, x2d, tab_chunks)


def _call_scan(x2d, params, table_f32, block_rows):
    rows = x2d.shape[0]
    table_len = int(table_f32.shape[0])
    n_elems = rows * LANE
    cost = pl.CostEstimate(
        flops=3 * table_len * n_elems,
        transcendentals=0,
        bytes_accessed=int(x2d.size * x2d.dtype.itemsize + n_elems * 4),
    )
    return pl.pallas_call(
        functools.partial(_lookup_scan_kernel, table_len=table_len),
        out_shape=jax.ShapeDtypeStruct((rows, LANE), jnp.float32),
        grid_spec=pltpu.PrefetchScalarGridSpec(
            num_scalar_prefetch=2,                      # params, table -> SMEM
            grid=(pl.cdiv(rows, block_rows),),
            in_specs=[pl.BlockSpec((block_rows, LANE), lambda i, p, t: (i, 0))],
            out_specs=pl.BlockSpec((block_rows, LANE), lambda i, p, t: (i, 0)),
        ),
        compiler_params=pltpu.CompilerParams(
            dimension_semantics=("parallel",),
            vmem_limit_bytes=VMEM_LIMIT_BYTES,
        ),
        cost_estimate=cost,
    )(params, table_f32, x2d)


@functools.lru_cache(maxsize=1)
def _gather_lowers():
    """One-time static capability check: does the XLU lane gather lower?

    AOT lower+compile on abstract shapes (no execution, no tracers involved),
    so it is trace-safe and runs once per process.
    """
    try:
        probe = pl.pallas_call(
            functools.partial(_lookup_gather_kernel, table_len=2, num_chunks=1),
            out_shape=jax.ShapeDtypeStruct((8, LANE), jnp.float32),
            grid_spec=pltpu.PrefetchScalarGridSpec(
                num_scalar_prefetch=1,
                grid=(1,),
                in_specs=[
                    pl.BlockSpec((8, LANE), lambda i, p: (i, 0)),
                    pl.BlockSpec((1, LANE), lambda i, p: (0, 0)),
                ],
                out_specs=pl.BlockSpec((8, LANE), lambda i, p: (i, 0)),
            ),
            compiler_params=pltpu.CompilerParams(
                dimension_semantics=("parallel",)),
        )
        jax.jit(probe).lower(
            jax.ShapeDtypeStruct((2,), jnp.float32),
            jax.ShapeDtypeStruct((8, LANE), jnp.float32),
            jax.ShapeDtypeStruct((1, LANE), jnp.float32),
        ).compile()
        return True
    except Exception:
        return False


# ----------------------------------------------------------------------------
# Public wrapper
# ----------------------------------------------------------------------------
def _pick_block_rows(rows):
    # Big enough to amortize the ~0.35 us/step pipeline overhead, small enough
    # that the 1-D grid keeps >= MIN_GRID_STEPS steps (v7x dual-TC sharding)
    # and the double-buffered footprint stays well inside VMEM_LIMIT_BYTES.
    target = _cdiv(rows, MIN_GRID_STEPS)
    return max(8, min(MAX_BLOCK_ROWS, _round_up(target, 8)))


def lookup_forward(x, input_min, input_max, forward_values):
    """Pallas equivalent of LookupFunction.forward (forward pass only).

    Precondition (same as the torch module): input_max != input_min.
    """
    table_f32 = jnp.asarray(forward_values, dtype=jnp.float32)
    table_len = int(table_f32.shape[0])
    idx_max = table_len - 1

    xmin = jnp.asarray(input_min, jnp.float32)
    xmax = jnp.asarray(input_max, jnp.float32)
    idx_scale = jnp.float32(idx_max) / (xmax - xmin)
    params = jnp.stack([idx_scale, xmin]).astype(jnp.float32)

    x = jnp.asarray(x)
    orig_shape = x.shape
    n = int(x.size)
    if n == 0:
        return jnp.zeros(orig_shape, jnp.float32)

    flat = x.reshape(-1)
    rows = n // LANE
    rem = n - rows * LANE

    use_gather = _gather_lowers()
    if use_gather:
        num_chunks = _cdiv(table_len, LANE)
        tab_chunks = (
            jnp.zeros((num_chunks * LANE,), jnp.float32)
            .at[:table_len].set(table_f32)
            .reshape(num_chunks, LANE)
        )

    parts = []
    if rows:
        # Aligned prefix: zero-copy reshape when n is 128-aligned; no full
        # array pad / output slice for unaligned sizes.
        x2d = flat[: rows * LANE].reshape(rows, LANE)
        block_rows = _pick_block_rows(rows)
        if use_gather:
            out2d = _call_gather(x2d, params, tab_chunks, block_rows, table_len)
        else:
            out2d = _call_scan(x2d, params, table_f32, block_rows)
        parts.append(out2d.reshape(-1))

    if rem:
        # <= 127-element tail: plain jnp, same clamp-before-and-after-cast math.
        tail = flat[rows * LANE:].astype(jnp.float32)
        f = jnp.clip(idx_scale * (tail - xmin), 0.0, float(idx_max))
        tidx = jnp.clip(f.astype(jnp.int32), 0, idx_max)
        parts.append(table_f32[tidx])

    out_flat = parts[0] if len(parts) == 1 else jnp.concatenate(parts)
    return out_flat.reshape(orig_shape)


def lookup_forward_ref(x, input_min, input_max, forward_values):
    """Pure-jnp reference mirroring the PyTorch forward exactly."""
    forward_values = jnp.asarray(forward_values, dtype=jnp.float32)
    idx_max = forward_values.shape[0] - 1
    idx_scale = idx_max / (jnp.float32(input_max) - jnp.float32(input_min))
    idx = (idx_scale * (jnp.asarray(x, jnp.float32) - jnp.float32(input_min))
           ).astype(jnp.int32)
    idx = jnp.clip(idx, 0, idx_max)
    return forward_values[idx]


if __name__ == "__main__":
    key = jax.random.PRNGKey(0)

    # Deterministic "module parameters": a 100-entry lookup table on [0, 10].
    table_x = jnp.linspace(0.0, 10.0, 100).astype(jnp.float32)
    forward_values = jnp.sin(table_x).astype(jnp.float32)   # forward table
    backward_values = jnp.cos(table_x).astype(jnp.float32)  # stored, unused in fwd
    input_min = 0.0
    input_max = 10.0

    k1, k2 = jax.random.split(key)
    # Small shapes consistent with an elementwise module; the second one
    # exercises the non-128-aligned prefix+tail path.
    x1 = jax.random.uniform(k1, (2, 4, 16, 16), jnp.float32, minval=-2.0, maxval=12.0)
    x2 = jax.random.uniform(k2, (3, 5, 1000), jnp.float32, minval=-2.0, maxval=12.0)

    for x in (x1, x2):
        out = jax.block_until_ready(
            lookup_forward(x, input_min, input_max, forward_values))
        ref = lookup_forward_ref(x, input_min, input_max, forward_values)
        assert out.shape == x.shape
        assert out.dtype == jnp.float32
        assert jnp.allclose(out, ref, atol=0.0, rtol=0.0), "mismatch vs reference"

    print("KERNEL_OK")
</pallas_src>

<mosaic_0001>
module attributes {stable_mosaic.version = 11 : i64} {
  func.func @_lookup_scan_kernel(%arg0: i32, %arg1: memref<2xf32, #tpu.memory_space<smem>>, %arg2: memref<100xf32, #tpu.memory_space<smem>>, %arg3: memref<8x128xf32, #tpu.memory_space<vmem>>, %arg4: memref<8x128xf32, #tpu.memory_space<vmem>>) attributes {dimension_semantics = [#tpu.dimension_semantics<parallel>], iteration_bounds = array<i64: 2>, scalar_prefetch = 2 : i64, scratch_operands = 0 : i64, tpu.core_type = #tpu.core_type<tc>, window_params = [{transform_indices = @transform_0, window_bounds = array<i64: 8, 128>}, {transform_indices = @transform_1, window_bounds = array<i64: 8, 128>}]} {
    %c0 = arith.constant 0 : index
    %0 = memref.load %arg1[%c0] : memref<2xf32, #tpu.memory_space<smem>>
    %c1 = arith.constant 1 : index
    %1 = memref.load %arg1[%c1] : memref<2xf32, #tpu.memory_space<smem>>
    %c0_0 = arith.constant 0 : index
    %c0_1 = arith.constant 0 : index
    %2 = vector.load %arg3[%c0_0, %c0_1] : memref<8x128xf32, #tpu.memory_space<vmem>>, vector<8x128xf32>
    %3 = vector.broadcast %1 : f32 to vector<8x128xf32>
    %4 = arith.subf %2, %3 : vector<8x128xf32>
    %5 = vector.broadcast %0 : f32 to vector<8x128xf32>
    %6 = arith.mulf %5, %4 : vector<8x128xf32>
    %cst = arith.constant 0.000000e+00 : f32
    %cst_2 = arith.constant 9.900000e+01 : f32
    %7 = vector.broadcast %cst : f32 to vector<8x128xf32>
    %8 = arith.maximumf %7, %6 : vector<8x128xf32>
    %9 = vector.broadcast %cst_2 : f32 to vector<8x128xf32>
    %10 = arith.minimumf %9, %8 : vector<8x128xf32>
    %11 = arith.fptosi %10 : vector<8x128xf32> to vector<8x128xi32>
    %c0_i32 = arith.constant 0 : i32
    %c99_i32 = arith.constant 99 : i32
    %12 = vector.broadcast %c0_i32 : i32 to vector<8x128xi32>
    %13 = arith.maxsi %12, %11 : vector<8x128xi32>
    %14 = vector.broadcast %c99_i32 : i32 to vector<8x128xi32>
    %15 = arith.minsi %14, %13 : vector<8x128xi32>
    %cst_3 = arith.constant 0.000000e+00 : f32
    %16 = vector.broadcast %cst_3 : f32 to vector<8x128xf32>
    %c0_i32_4 = arith.constant 0 : i32
    %17 = vector.broadcast %c0_i32_4 : i32 to vector<8x128xi32>
    %18 = arith.cmpi eq, %15, %17 : vector<8x128xi32>
    %19 = arith.index_cast %c0_i32_4 : i32 to index
    %20 = memref.load %arg2[%19] : memref<100xf32, #tpu.memory_space<smem>>
    %21 = vector.broadcast %20 : f32 to vector<8x128xf32>
    %22 = arith.select %18, %21, %16 : vector<8x128xi1>, vector<8x128xf32>
    %c1_i32 = arith.constant 1 : i32
    %23 = vector.broadcast %c1_i32 : i32 to vector<8x128xi32>
    %24 = arith.cmpi eq, %15, %23 : vector<8x128xi32>
    %25 = arith.index_cast %c1_i32 : i32 to index
    %26 = memref.load %arg2[%25] : memref<100xf32, #tpu.memory_space<smem>>
    %27 = vector.broadcast %26 : f32 to vector<8x128xf32>
    %28 = arith.select %24, %27, %22 : vector<8x128xi1>, vector<8x128xf32>
    %c2_i32 = arith.constant 2 : i32
    %29 = vector.broadcast %c2_i32 : i32 to vector<8x128xi32>
    %30 = arith.cmpi eq, %15, %29 : vector<8x128xi32>
    %31 = arith.index_cast %c2_i32 : i32 to index
    %32 = memref.load %arg2[%31] : memref<100xf32, #tpu.memory_space<smem>>
    %33 = vector.broadcast %32 : f32 to vector<8x128xf32>
    %34 = arith.select %30, %33, %28 : vector<8x128xi1>, vector<8x128xf32>
    %c3_i32 = arith.constant 3 : i32
    %35 = vector.broadcast %c3_i32 : i32 to vector<8x128xi32>
    %36 = arith.cmpi eq, %15, %35 : vector<8x128xi32>
    %37 = arith.index_cast %c3_i32 : i32 to index
    %38 = memref.load %arg2[%37] : memref<100xf32, #tpu.memory_space<smem>>
    %39 = vector.broadcast %38 : f32 to vector<8x128xf32>
    %40 = arith.select %36, %39, %34 : vector<8x128xi1>, vector<8x128xf32>
    %c4_i32 = arith.constant 4 : i32
    %41 = vector.broadcast %c4_i32 : i32 to vector<8x128xi32>
    %42 = arith.cmpi eq, %15, %41 : vector<8x128xi32>
    %43 = arith.index_cast %c4_i32 : i32 to index
    %44 = memref.load %arg2[%43] : memref<100xf32, #tpu.memory_space<smem>>
    %45 = vector.broadcast %44 : f32 to vector<8x128xf32>
    %46 = arith.select %42, %45, %40 : vector<8x128xi1>, vector<8x128xf32>
    %c5_i32 = arith.constant 5 : i32
    %47 = vector.broadcast %c5_i32 : i32 to vector<8x128xi32>
    %48 = arith.cmpi eq, %15, %47 : vector<8x128xi32>
    %49 = arith.index_cast %c5_i32 : i32 to index
    %50 = memref.load %arg2[%49] : memref<100xf32, #tpu.memory_space<smem>>
    %51 = vector.broadcast %50 : f32 to vector<8x128xf32>
    %52 = arith.select %48, %51, %46 : vector<8x128xi1>, vector<8x128xf32>
    %c6_i32 = arith.constant 6 : i32
    %53 = vector.broadcast %c6_i32 : i32 to vector<8x128xi32>
    %54 = arith.cmpi eq, %15, %53 : vector<8x128xi32>
    %55 = arith.index_cast %c6_i32 : i32 to index
    %56 = memref.load %arg2[%55] : memref<100xf32, #tpu.memory_space<smem>>
    %57 = vector.broadcast %56 : f32 to vector<8x128xf32>
    %58 = arith.select %54, %57, %52 : vector<8x128xi1>, vector<8x128xf32>
    %c7_i32 = arith.constant 7 : i32
    %59 = vector.broadcast %c7_i32 : i32 to vector<8x128xi32>
    %60 = arith.cmpi eq, %15, %59 : vector<8x128xi32>
    %61 = arith.index_cast %c7_i32 : i32 to index
    %62 = memref.load %arg2[%61] : memref<100xf32, #tpu.memory_space<smem>>
    %63 = vector.broadcast %62 : f32 to vector<8x128xf32>
    %64 = arith.select %60, %63, %58 : vector<8x128xi1>, vector<8x128xf32>
    %c8_i32 = arith.constant 8 : i32
    %65 = vector.broadcast %c8_i32 : i32 to vector<8x128xi32>
    %66 = arith.cmpi eq, %15, %65 : vector<8x128xi32>
    %67 = arith.index_cast %c8_i32 : i32 to index
    %68 = memref.load %arg2[%67] : memref<100xf32, #tpu.memory_space<smem>>
    %69 = vector.broadcast %68 : f32 to vector<8x128xf32>
    %70 = arith.select %66, %69, %64 : vector<8x128xi1>, vector<8x128xf32>
    %c9_i32 = arith.constant 9 : i32
    %71 = vector.broadcast %c9_i32 : i32 to vector<8x128xi32>
    %72 = arith.cmpi eq, %15, %71 : vector<8x128xi32>
    %73 = arith.index_cast %c9_i32 : i32 to index
    %74 = memref.load %arg2[%73] : memref<100xf32, #tpu.memory_space<smem>>
    %75 = vector.broadcast %74 : f32 to vector<8x128xf32>
    %76 = arith.select %72, %75, %70 : vector<8x128xi1>, vector<8x128xf32>
    %c10_i32 = arith.constant 10 : i32
    %77 = vector.broadcast %c10_i32 : i32 to vector<8x128xi32>
    %78 = arith.cmpi eq, %15, %77 : vector<8x128xi32>
    %79 = arith.index_cast %c10_i32 : i32 to index
    %80 = memref.load %arg2[%79] : memref<100xf32, #tpu.memory_space<smem>>
    %81 = vector.broadcast %80 : f32 to vector<8x128xf32>
    %82 = arith.select %78, %81, %76 : vector<8x128xi1>, vector<8x128xf32>
    %c11_i32 = arith.constant 11 : i32
    %83 = vector.broadcast %c11_i32 : i32 to vector<8x128xi32>
    %84 = arith.cmpi eq, %15, %83 : vector<8x128xi32>
    %85 = arith.index_cast %c11_i32 : i32 to index
    %86 = memref.load %arg2[%85] : memref<100xf32, #tpu.memory_space<smem>>
    %87 = vector.broadcast %86 : f32 to vector<8x128xf32>
    %88 = arith.select %84, %87, %82 : vector<8x128xi1>, vector<8x128xf32>
    %c12_i32 = arith.constant 12 : i32
    %89 = vector.broadcast %c12_i32 : i32 to vector<8x128xi32>
    %90 = arith.cmpi eq, %15, %89 : vector<8x128xi32>
    %91 = arith.index_cast %c12_i32 : i32 to index
    %92 = memref.load %arg2[%91] : memref<100xf32, #tpu.memory_space<smem>>
    %93 = vector.broadcast %92 : f32 to vector<8x128xf32>
    %94 = arith.select %90, %93, %88 : vector<8x128xi1>, vector<8x128xf32>
    %c13_i32 = arith.constant 13 : i32
    %95 = vector.broadcast %c13_i32 : i32 to vector<8x128xi32>
    %96 = arith.cmpi eq, %15, %95 : vector<8x128xi32>
    %97 = arith.index_cast %c13_i32 : i32 to index
    %98 = memref.load %arg2[%97] : memref<100xf32, #tpu.memory_space<smem>>
    %99 = vector.broadcast %98 : f32 to vector<8x128xf32>
    %100 = arith.select %96, %99, %94 : vector<8x128xi1>, vector<8x128xf32>
    %c14_i32 = arith.constant 14 : i32
    %101 = vector.broadcast %c14_i32 : i32 to vector<8x128xi32>
    %102 = arith.cmpi eq, %15, %101 : vector<8x128xi32>
    %103 = arith.index_cast %c14_i32 : i32 to index
    %104 = memref.load %arg2[%103] : memref<100xf32, #tpu.memory_space<smem>>
    %105 = vector.broadcast %104 : f32 to vector<8x128xf32>
    %106 = arith.select %102, %105, %100 : vector<8x128xi1>, vector<8x128xf32>
    %c15_i32 = arith.constant 15 : i32
    %107 = vector.broadcast %c15_i32 : i32 to vector<8x128xi32>
    %108 = arith.cmpi eq, %15, %107 : vector<8x128xi32>
    %109 = arith.index_cast %c15_i32 : i32 to index
    %110 = memref.load %arg2[%109] : memref<100xf32, #tpu.memory_space<smem>>
    %111 = vector.broadcast %110 : f32 to vector<8x128xf32>
    %112 = arith.select %108, %111, %106 : vector<8x128xi1>, vector<8x128xf32>
    %c16_i32 = arith.constant 16 : i32
    %113 = vector.broadcast %c16_i32 : i32 to vector<8x128xi32>
    %114 = arith.cmpi eq, %15, %113 : vector<8x128xi32>
    %115 = arith.index_cast %c16_i32 : i32 to index
    %116 = memref.load %arg2[%115] : memref<100xf32, #tpu.memory_space<smem>>
    %117 = vector.broadcast %116 : f32 to vector<8x128xf32>
    %118 = arith.select %114, %117, %112 : vector<8x128xi1>, vector<8x128xf32>
    %c17_i32 = arith.constant 17 : i32
    %119 = vector.broadcast %c17_i32 : i32 to vector<8x128xi32>
    %120 = arith.cmpi eq, %15, %119 : vector<8x128xi32>
    %121 = arith.index_cast %c17_i32 : i32 to index
    %122 = memref.load %arg2[%121] : memref<100xf32, #tpu.memory_space<smem>>
    %123 = vector.broadcast %122 : f32 to vector<8x128xf32>
    %124 = arith.select %120, %123, %118 : vector<8x128xi1>, vector<8x128xf32>
    %c18_i32 = arith.constant 18 : i32
    %125 = vector.broadcast %c18_i32 : i32 to vector<8x128xi32>
    %126 = arith.cmpi eq, %15, %125 : vector<8x128xi32>
    %127 = arith.index_cast %c18_i32 : i32 to index
    %128 = memref.load %arg2[%127] : memref<100xf32, #tpu.memory_space<smem>>
    %129 = vector.broadcast %128 : f32 to vector<8x128xf32>
    %130 = arith.select %126, %129, %124 : vector<8x128xi1>, vector<8x128xf32>
    %c19_i32 = arith.constant 19 : i32
    %131 = vector.broadcast %c19_i32 : i32 to vector<8x128xi32>
    %132 = arith.cmpi eq, %15, %131 : vector<8x128xi32>
    %133 = arith.index_cast %c19_i32 : i32 to index
    %134 = memref.load %arg2[%133] : memref<100xf32, #tpu.memory_space<smem>>
    %135 = vector.broadcast %134 : f32 to vector<8x128xf32>
    %136 = arith.select %132, %135, %130 : vector<8x128xi1>, vector<8x128xf32>
    %c20_i32 = arith.constant 20 : i32
    %137 = vector.broadcast %c20_i32 : i32 to vector<8x128xi32>
    %138 = arith.cmpi eq, %15, %137 : vector<8x128xi32>
    %139 = arith.index_cast %c20_i32 : i32 to index
    %140 = memref.load %arg2[%139] : memref<100xf32, #tpu.memory_space<smem>>
    %141 = vector.broadcast %140 : f32 to vector<8x128xf32>
    %142 = arith.select %138, %141, %136 : vector<8x128xi1>, vector<8x128xf32>
    %c21_i32 = arith.constant 21 : i32
    %143 = vector.broadcast %c21_i32 : i32 to vector<8x128xi32>
    %144 = arith.cmpi eq, %15, %143 : vector<8x128xi32>
    %145 = arith.index_cast %c21_i32 : i32 to index
    %146 = memref.load %arg2[%145] : memref<100xf32, #tpu.memory_space<smem>>
    %147 = vector.broadcast %146 : f32 to vector<8x128xf32>
    %148 = arith.select %144, %147, %142 : vector<8x128xi1>, vector<8x128xf32>
    %c22_i32 = arith.constant 22 : i32
    %149 = vector.broadcast %c22_i32 : i32 to vector<8x128xi32>
    %150 = arith.cmpi eq, %15, %149 : vector<8x128xi32>
    %151 = arith.index_cast %c22_i32 : i32 to index
    %152 = memref.load %arg2[%151] : memref<100xf32, #tpu.memory_space<smem>>
    %153 = vector.broadcast %152 : f32 to vector<8x128xf32>
    %154 = arith.select %150, %153, %148 : vector<8x128xi1>, vector<8x128xf32>
    %c23_i32 = arith.constant 23 : i32
    %155 = vector.broadcast %c23_i32 : i32 to vector<8x128xi32>
    %156 = arith.cmpi eq, %15, %155 : vector<8x128xi32>
    %157 = arith.index_cast %c23_i32 : i32 to index
    %158 = memref.load %arg2[%157] : memref<100xf32, #tpu.memory_space<smem>>
    %159 = vector.broadcast %158 : f32 to vector<8x128xf32>
    %160 = arith.select %156, %159, %154 : vector<8x128xi1>, vector<8x128xf32>
    %c24_i32 = arith.constant 24 : i32
    %161 = vector.broadcast %c24_i32 : i32 to vector<8x128xi32>
    %162 = arith.cmpi eq, %15, %161 : vector<8x128xi32>
    %163 = arith.index_cast %c24_i32 : i32 to index
    %164 = memref.load %arg2[%163] : memref<100xf32, #tpu.memory_space<smem>>
    %165 = vector.broadcast %164 : f32 to vector<8x128xf32>
    %166 = arith.select %162, %165, %160 : vector<8x128xi1>, vector<8x128xf32>
    %c25_i32 = arith.constant 25 : i32
    %167 = vector.broadcast %c25_i32 : i32 to vector<8x128xi32>
    %168 = arith.cmpi eq, %15, %167 : vector<8x128xi32>
    %169 = arith.index_cast %c25_i32 : i32 to index
    %170 = memref.load %arg2[%169] : memref<100xf32, #tpu.memory_space<smem>>
    %171 = vector.broadcast %170 : f32 to vector<8x128xf32>
    %172 = arith.select %168, %171, %166 : vector<8x128xi1>, vector<8x128xf32>
    %c26_i32 = arith.constant 26 : i32
    %173 = vector.broadcast %c26_i32 : i32 to vector<8x128xi32>
    %174 = arith.cmpi eq, %15, %173 : vector<8x128xi32>
    %175 = arith.index_cast %c26_i32 : i32 to index
    %176 = memref.load %arg2[%175] : memref<100xf32, #tpu.memory_space<smem>>
    %177 = vector.broadcast %176 : f32 to vector<8x128xf32>
    %178 = arith.select %174, %177, %172 : vector<8x128xi1>, vector<8x128xf32>
    %c27_i32 = arith.constant 27 : i32
    %179 = vector.broadcast %c27_i32 : i32 to vector<8x128xi32>
    %180 = arith.cmpi eq, %15, %179 : vector<8x128xi32>
    %181 = arith.index_cast %c27_i32 : i32 to index
    %182 = memref.load %arg2[%181] : memref<100xf32, #tpu.memory_space<smem>>
    %183 = vector.broadcast %182 : f32 to vector<8x128xf32>
    %184 = arith.select %180, %183, %178 : vector<8x128xi1>, vector<8x128xf32>
    %c28_i32 = arith.constant 28 : i32
    %185 = vector.broadcast %c28_i32 : i32 to vector<8x128xi32>
    %186 = arith.cmpi eq, %15, %185 : vector<8x128xi32>
    %187 = arith.index_cast %c28_i32 : i32 to index
    %188 = memref.load %arg2[%187] : memref<100xf32, #tpu.memory_space<smem>>
    %189 = vector.broadcast %188 : f32 to vector<8x128xf32>
    %190 = arith.select %186, %189, %184 : vector<8x128xi1>, vector<8x128xf32>
    %c29_i32 = arith.constant 29 : i32
    %191 = vector.broadcast %c29_i32 : i32 to vector<8x128xi32>
    %192 = arith.cmpi eq, %15, %191 : vector<8x128xi32>
    %193 = arith.index_cast %c29_i32 : i32 to index
    %194 = memref.load %arg2[%193] : memref<100xf32, #tpu.memory_space<smem>>
    %195 = vector.broadcast %194 : f32 to vector<8x128xf32>
    %196 = arith.select %192, %195, %190 : vector<8x128xi1>, vector<8x128xf32>
    %c30_i32 = arith.constant 30 : i32
    %197 = vector.broadcast %c30_i32 : i32 to vector<8x128xi32>
    %198 = arith.cmpi eq, %15, %197 : vector<8x128xi32>
    %199 = arith.index_cast %c30_i32 : i32 to index
    %200 = memref.load %arg2[%199] : memref<100xf32, #tpu.memory_space<smem>>
    %201 = vector.broadcast %200 : f32 to vector<8x128xf32>
    %202 = arith.select %198, %201, %196 : vector<8x128xi1>, vector<8x128xf32>
    %c31_i32 = arith.constant 31 : i32
    %203 = vector.broadcast %c31_i32 : i32 to vector<8x128xi32>
    %204 = arith.cmpi eq, %15, %203 : vector<8x128xi32>
    %205 = arith.index_cast %c31_i32 : i32 to index
    %206 = memref.load %arg2[%205] : memref<100xf32, #tpu.memory_space<smem>>
    %207 = vector.broadcast %206 : f32 to vector<8x128xf32>
    %208 = arith.select %204, %207, %202 : vector<8x128xi1>, vector<8x128xf32>
    %c32_i32 = arith.constant 32 : i32
    %209 = vector.broadcast %c32_i32 : i32 to vector<8x128xi32>
    %210 = arith.cmpi eq, %15, %209 : vector<8x128xi32>
    %211 = arith.index_cast %c32_i32 : i32 to index
    %212 = memref.load %arg2[%211] : memref<100xf32, #tpu.memory_space<smem>>
    %213 = vector.broadcast %212 : f32 to vector<8x128xf32>
    %214 = arith.select %210, %213, %208 : vector<8x128xi1>, vector<8x128xf32>
    %c33_i32 = arith.constant 33 : i32
    %215 = vector.broadcast %c33_i32 : i32 to vector<8x128xi32>
    %216 = arith.cmpi eq, %15, %215 : vector<8x128xi32>
    %217 = arith.index_cast %c33_i32 : i32 to index
    %218 = memref.load %arg2[%217] : memref<100xf32, #tpu.memory_space<smem>>
    %219 = vector.broadcast %218 : f32 to vector<8x128xf32>
    %220 = arith.select %216, %219, %214 : vector<8x128xi1>, vector<8x128xf32>
    %c34_i32 = arith.constant 34 : i32
    %221 = vector.broadcast %c34_i32 : i32 to vector<8x128xi32>
    %222 = arith.cmpi eq, %15, %221 : vector<8x128xi32>
    %223 = arith.index_cast %c34_i32 : i32 to index
    %224 = memref.load %arg2[%223] : memref<100xf32, #tpu.memory_space<smem>>
    %225 = vector.broadcast %224 : f32 to vector<8x128xf32>
    %226 = arith.select %222, %225, %220 : vector<8x128xi1>, vector<8x128xf32>
    %c35_i32 = arith.constant 35 : i32
    %227 = vector.broadcast %c35_i32 : i32 to vector<8x128xi32>
    %228 = arith.cmpi eq, %15, %227 : vector<8x128xi32>
    %229 = arith.index_cast %c35_i32 : i32 to index
    %230 = memref.load %arg2[%229] : memref<100xf32, #tpu.memory_space<smem>>
    %231 = vector.broadcast %230 : f32 to vector<8x128xf32>
    %232 = arith.select %228, %231, %226 : vector<8x128xi1>, vector<8x128xf32>
    %c36_i32 = arith.constant 36 : i32
    %233 = vector.broadcast %c36_i32 : i32 to vector<8x128xi32>
    %234 = arith.cmpi eq, %15, %233 : vector<8x128xi32>
    %235 = arith.index_cast %c36_i32 : i32 to index
    %236 = memref.load %arg2[%235] : memref<100xf32, #tpu.memory_space<smem>>
    %237 = vector.broadcast %236 : f32 to vector<8x128xf32>
    %238 = arith.select %234, %237, %232 : vector<8x128xi1>, vector<8x128xf32>
    %c37_i32 = arith.constant 37 : i32
    %239 = vector.broadcast %c37_i32 : i32 to vector<8x128xi32>
    %240 = arith.cmpi eq, %15, %239 : vector<8x128xi32>
    %241 = arith.index_cast %c37_i32 : i32 to index
    %242 = memref.load %arg2[%241] : memref<100xf32, #tpu.memory_space<smem>>
    %243 = vector.broadcast %242 : f32 to vector<8x128xf32>
    %244 = arith.select %240, %243, %238 : vector<8x128xi1>, vector<8x128xf32>
    %c38_i32 = arith.constant 38 : i32
    %245 = vector.broadcast %c38_i32 : i32 to vector<8x128xi32>
    %246 = arith.cmpi eq, %15, %245 : vector<8x128xi32>
    %247 = arith.index_cast %c38_i32 : i32 to index
    %248 = memref.load %arg2[%247] : memref<100xf32, #tpu.memory_space<smem>>
    %249 = vector.broadcast %248 : f32 to vector<8x128xf32>
    %250 = arith.select %246, %249, %244 : vector<8x128xi1>, vector<8x128xf32>
    %c39_i32 = arith.constant 39 : i32
    %251 = vector.broadcast %c39_i32 : i32 to vector<8x128xi32>
    %252 = arith.cmpi eq, %15, %251 : vector<8x128xi32>
    %253 = arith.index_cast %c39_i32 : i32 to index
    %254 = memref.load %arg2[%253] : memref<100xf32, #tpu.memory_space<smem>>
    %255 = vector.broadcast %254 : f32 to vector<8x128xf32>
    %256 = arith.select %252, %255, %250 : vector<8x128xi1>, vector<8x128xf32>
    %c40_i32 = arith.constant 40 : i32
    %257 = vector.broadcast %c40_i32 : i32 to vector<8x128xi32>
    %258 = arith.cmpi eq, %15, %257 : vector<8x128xi32>
    %259 = arith.index_cast %c40_i32 : i32 to index
    %260 = memref.load %arg2[%259] : memref<100xf32, #tpu.memory_space<smem>>
    %261 = vector.broadcast %260 : f32 to vector<8x128xf32>
    %262 = arith.select %258, %261, %256 : vector<8x128xi1>, vector<8x128xf32>
    %c41_i32 = arith.constant 41 : i32
    %263 = vector.broadcast %c41_i32 : i32 to vector<8x128xi32>
    %264 = arith.cmpi eq, %15, %263 : vector<8x128xi32>
    %265 = arith.index_cast %c41_i32 : i32 to index
    %266 = memref.load %arg2[%265] : memref<100xf32, #tpu.memory_space<smem>>
    %267 = vector.broadcast %266 : f32 to vector<8x128xf32>
    %268 = arith.select %264, %267, %262 : vector<8x128xi1>, vector<8x128xf32>
    %c42_i32 = arith.constant 42 : i32
    %269 = vector.broadcast %c42_i32 : i32 to vector<8x128xi32>
    %270 = arith.cmpi eq, %15, %269 : vector<8x128xi32>
    %271 = arith.index_cast %c42_i32 : i32 to index
    %272 = memref.load %arg2[%271] : memref<100xf32, #tpu.memory_space<smem>>
    %273 = vector.broadcast %272 : f32 to vector<8x128xf32>
    %274 = arith.select %270, %273, %268 : vector<8x128xi1>, vector<8x128xf32>
    %c43_i32 = arith.constant 43 : i32
    %275 = vector.broadcast %c43_i32 : i32 to vector<8x128xi32>
    %276 = arith.cmpi eq, %15, %275 : vector<8x128xi32>
    %277 = arith.index_cast %c43_i32 : i32 to index
    %278 = memref.load %arg2[%277] : memref<100xf32, #tpu.memory_space<smem>>
    %279 = vector.broadcast %278 : f32 to vector<8x128xf32>
    %280 = arith.select %276, %279, %274 : vector<8x128xi1>, vector<8x128xf32>
    %c44_i32 = arith.constant 44 : i32
    %281 = vector.broadcast %c44_i32 : i32 to vector<8x128xi32>
    %282 = arith.cmpi eq, %15, %281 : vector<8x128xi32>
    %283 = arith.index_cast %c44_i32 : i32 to index
    %284 = memref.load %arg2[%283] : memref<100xf32, #tpu.memory_space<smem>>
    %285 = vector.broadcast %284 : f32 to vector<8x128xf32>
    %286 = arith.select %282, %285, %280 : vector<8x128xi1>, vector<8x128xf32>
    %c45_i32 = arith.constant 45 : i32
    %287 = vector.broadcast %c45_i32 : i32 to vector<8x128xi32>
    %288 = arith.cmpi eq, %15, %287 : vector<8x128xi32>
    %289 = arith.index_cast %c45_i32 : i32 to index
    %290 = memref.load %arg2[%289] : memref<100xf32, #tpu.memory_space<smem>>
    %291 = vector.broadcast %290 : f32 to vector<8x128xf32>
    %292 = arith.select %288, %291, %286 : vector<8x128xi1>, vector<8x128xf32>
    %c46_i32 = arith.constant 46 : i32
    %293 = vector.broadcast %c46_i32 : i32 to vector<8x128xi32>
    %294 = arith.cmpi eq, %15, %293 : vector<8x128xi32>
    %295 = arith.index_cast %c46_i32 : i32 to index
    %296 = memref.load %arg2[%295] : memref<100xf32, #tpu.memory_space<smem>>
    %297 = vector.broadcast %296 : f32 to vector<8x128xf32>
    %298 = arith.select %294, %297, %292 : vector<8x128xi1>, vector<8x128xf32>
    %c47_i32 = arith.constant 47 : i32
    %299 = vector.broadcast %c47_i32 : i32 to vector<8x128xi32>
    %300 = arith.cmpi eq, %15, %299 : vector<8x128xi32>
    %301 = arith.index_cast %c47_i32 : i32 to index
    %302 = memref.load %arg2[%301] : memref<100xf32, #tpu.memory_space<smem>>
    %303 = vector.broadcast %302 : f32 to vector<8x128xf32>
    %304 = arith.select %300, %303, %298 : vector<8x128xi1>, vector<8x128xf32>
    %c48_i32 = arith.constant 48 : i32
    %305 = vector.broadcast %c48_i32 : i32 to vector<8x128xi32>
    %306 = arith.cmpi eq, %15, %305 : vector<8x128xi32>
    %307 = arith.index_cast %c48_i32 : i32 to index
    %308 = memref.load %arg2[%307] : memref<100xf32, #tpu.memory_space<smem>>
    %309 = vector.broadcast %308 : f32 to vector<8x128xf32>
    %310 = arith.select %306, %309, %304 : vector<8x128xi1>, vector<8x128xf32>
    %c49_i32 = arith.constant 49 : i32
    %311 = vector.broadcast %c49_i32 : i32 to vector<8x128xi32>
    %312 = arith.cmpi eq, %15, %311 : vector<8x128xi32>
    %313 = arith.index_cast %c49_i32 : i32 to index
    %314 = memref.load %arg2[%313] : memref<100xf32, #tpu.memory_space<smem>>
    %315 = vector.broadcast %314 : f32 to vector<8x128xf32>
    %316 = arith.select %312, %315, %310 : vector<8x128xi1>, vector<8x128xf32>
    %c50_i32 = arith.constant 50 : i32
    %317 = vector.broadcast %c50_i32 : i32 to vector<8x128xi32>
    %318 = arith.cmpi eq, %15, %317 : vector<8x128xi32>
    %319 = arith.index_cast %c50_i32 : i32 to index
    %320 = memref.load %arg2[%319] : memref<100xf32, #tpu.memory_space<smem>>
    %321 = vector.broadcast %320 : f32 to vector<8x128xf32>
    %322 = arith.select %318, %321, %316 : vector<8x128xi1>, vector<8x128xf32>
    %c51_i32 = arith.constant 51 : i32
    %323 = vector.broadcast %c51_i32 : i32 to vector<8x128xi32>
    %324 = arith.cmpi eq, %15, %323 : vector<8x128xi32>
    %325 = arith.index_cast %c51_i32 : i32 to index
    %326 = memref.load %arg2[%325] : memref<100xf32, #tpu.memory_space<smem>>
    %327 = vector.broadcast %326 : f32 to vector<8x128xf32>
    %328 = arith.select %324, %327, %322 : vector<8x128xi1>, vector<8x128xf32>
    %c52_i32 = arith.constant 52 : i32
    %329 = vector.broadcast %c52_i32 : i32 to vector<8x128xi32>
    %330 = arith.cmpi eq, %15, %329 : vector<8x128xi32>
    %331 = arith.index_cast %c52_i32 : i32 to index
    %332 = memref.load %arg2[%331] : memref<100xf32, #tpu.memory_space<smem>>
    %333 = vector.broadcast %332 : f32 to vector<8x128xf32>
    %334 = arith.select %330, %333, %328 : vector<8x128xi1>, vector<8x128xf32>
    %c53_i32 = arith.constant 53 : i32
    %335 = vector.broadcast %c53_i32 : i32 to vector<8x128xi32>
    %336 = arith.cmpi eq, %15, %335 : vector<8x128xi32>
    %337 = arith.index_cast %c53_i32 : i32 to index
    %338 = memref.load %arg2[%337] : memref<100xf32, #tpu.memory_space<smem>>
    %339 = vector.broadcast %338 : f32 to vector<8x128xf32>
    %340 = arith.select %336, %339, %334 : vector<8x128xi1>, vector<8x128xf32>
    %c54_i32 = arith.constant 54 : i32
    %341 = vector.broadcast %c54_i32 : i32 to vector<8x128xi32>
    %342 = arith.cmpi eq, %15, %341 : vector<8x128xi32>
    %343 = arith.index_cast %c54_i32 : i32 to index
    %344 = memref.load %arg2[%343] : memref<100xf32, #tpu.memory_space<smem>>
    %345 = vector.broadcast %344 : f32 to vector<8x128xf32>
    %346 = arith.select %342, %345, %340 : vector<8x128xi1>, vector<8x128xf32>
    %c55_i32 = arith.constant 55 : i32
    %347 = vector.broadcast %c55_i32 : i32 to vector<8x128xi32>
    %348 = arith.cmpi eq, %15, %347 : vector<8x128xi32>
    %349 = arith.index_cast %c55_i32 : i32 to index
    %350 = memref.load %arg2[%349] : memref<100xf32, #tpu.memory_space<smem>>
    %351 = vector.broadcast %350 : f32 to vector<8x128xf32>
    %352 = arith.select %348, %351, %346 : vector<8x128xi1>, vector<8x128xf32>
    %c56_i32 = arith.constant 56 : i32
    %353 = vector.broadcast %c56_i32 : i32 to vector<8x128xi32>
    %354 = arith.cmpi eq, %15, %353 : vector<8x128xi32>
    %355 = arith.index_cast %c56_i32 : i32 to index
    %356 = memref.load %arg2[%355] : memref<100xf32, #tpu.memory_space<smem>>
    %357 = vector.broadcast %356 : f32 to vector<8x128xf32>
    %358 = arith.select %354, %357, %352 : vector<8x128xi1>, vector<8x128xf32>
    %c57_i32 = arith.constant 57 : i32
    %359 = vector.broadcast %c57_i32 : i32 to vector<8x128xi32>
    %360 = arith.cmpi eq, %15, %359 : vector<8x128xi32>
    %361 = arith.index_cast %c57_i32 : i32 to index
    %362 = memref.load %arg2[%361] : memref<100xf32, #tpu.memory_space<smem>>
    %363 = vector.broadcast %362 : f32 to vector<8x128xf32>
    %364 = arith.select %360, %363, %358 : vector<8x128xi1>, vector<8x128xf32>
    %c58_i32 = arith.constant 58 : i32
    %365 = vector.broadcast %c58_i32 : i32 to vector<8x128xi32>
    %366 = arith.cmpi eq, %15, %365 : vector<8x128xi32>
    %367 = arith.index_cast %c58_i32 : i32 to index
    %368 = memref.load %arg2[%367] : memref<100xf32, #tpu.memory_space<smem>>
    %369 = vector.broadcast %368 : f32 to vector<8x128xf32>
    %370 = arith.select %366, %369, %364 : vector<8x128xi1>, vector<8x128xf32>
    %c59_i32 = arith.constant 59 : i32
    %371 = vector.broadcast %c59_i32 : i32 to vector<8x128xi32>
    %372 = arith.cmpi eq, %15, %371 : vector<8x128xi32>
    %373 = arith.index_cast %c59_i32 : i32 to index
    %374 = memref.load %arg2[%373] : memref<100xf32, #tpu.memory_space<smem>>
    %375 = vector.broadcast %374 : f32 to vector<8x128xf32>
    %376 = arith.select %372, %375, %370 : vector<8x128xi1>, vector<8x128xf32>
    %c60_i32 = arith.constant 60 : i32
    %377 = vector.broadcast %c60_i32 : i32 to vector<8x128xi32>
    %378 = arith.cmpi eq, %15, %377 : vector<8x128xi32>
    %379 = arith.index_cast %c60_i32 : i32 to index
    %380 = memref.load %arg2[%379] : memref<100xf32, #tpu.memory_space<smem>>
    %381 = vector.broadcast %380 : f32 to vector<8x128xf32>
    %382 = arith.select %378, %381, %376 : vector<8x128xi1>, vector<8x128xf32>
    %c61_i32 = arith.constant 61 : i32
    %383 = vector.broadcast %c61_i32 : i32 to vector<8x128xi32>
    %384 = arith.cmpi eq, %15, %383 : vector<8x128xi32>
    %385 = arith.index_cast %c61_i32 : i32 to index
    %386 = memref.load %arg2[%385] : memref<100xf32, #tpu.memory_space<smem>>
    %387 = vector.broadcast %386 : f32 to vector<8x128xf32>
    %388 = arith.select %384, %387, %382 : vector<8x128xi1>, vector<8x128xf32>
    %c62_i32 = arith.constant 62 : i32
    %389 = vector.broadcast %c62_i32 : i32 to vector<8x128xi32>
    %390 = arith.cmpi eq, %15, %389 : vector<8x128xi32>
    %391 = arith.index_cast %c62_i32 : i32 to index
    %392 = memref.load %arg2[%391] : memref<100xf32, #tpu.memory_space<smem>>
    %393 = vector.broadcast %392 : f32 to vector<8x128xf32>
    %394 = arith.select %390, %393, %388 : vector<8x128xi1>, vector<8x128xf32>
    %c63_i32 = arith.constant 63 : i32
    %395 = vector.broadcast %c63_i32 : i32 to vector<8x128xi32>
    %396 = arith.cmpi eq, %15, %395 : vector<8x128xi32>
    %397 = arith.index_cast %c63_i32 : i32 to index
    %398 = memref.load %arg2[%397] : memref<100xf32, #tpu.memory_space<smem>>
    %399 = vector.broadcast %398 : f32 to vector<8x128xf32>
    %400 = arith.select %396, %399, %394 : vector<8x128xi1>, vector<8x128xf32>
    %c64_i32 = arith.constant 64 : i32
    %401 = vector.broadcast %c64_i32 : i32 to vector<8x128xi32>
    %402 = arith.cmpi eq, %15, %401 : vector<8x128xi32>
    %403 = arith.index_cast %c64_i32 : i32 to index
    %404 = memref.load %arg2[%403] : memref<100xf32, #tpu.memory_space<smem>>
    %405 = vector.broadcast %404 : f32 to vector<8x128xf32>
    %406 = arith.select %402, %405, %400 : vector<8x128xi1>, vector<8x128xf32>
    %c65_i32 = arith.constant 65 : i32
    %407 = vector.broadcast %c65_i32 : i32 to vector<8x128xi32>
    %408 = arith.cmpi eq, %15, %407 : vector<8x128xi32>
    %409 = arith.index_cast %c65_i32 : i32 to index
    %410 = memref.load %arg2[%409] : memref<100xf32, #tpu.memory_space<smem>>
    %411 = vector.broadcast %410 : f32 to vector<8x128xf32>
    %412 = arith.select %408, %411, %406 : vector<8x128xi1>, vector<8x128xf32>
    %c66_i32 = arith.constant 66 : i32
    %413 = vector.broadcast %c66_i32 : i32 to vector<8x128xi32>
    %414 = arith.cmpi eq, %15, %413 : vector<8x128xi32>
    %415 = arith.index_cast %c66_i32 : i32 to index
    %416 = memref.load %arg2[%415] : memref<100xf32, #tpu.memory_space<smem>>
    %417 = vector.broadcast %416 : f32 to vector<8x128xf32>
    %418 = arith.select %414, %417, %412 : vector<8x128xi1>, vector<8x128xf32>
    %c67_i32 = arith.constant 67 : i32
    %419 = vector.broadcast %c67_i32 : i32 to vector<8x128xi32>
    %420 = arith.cmpi eq, %15, %419 : vector<8x128xi32>
    %421 = arith.index_cast %c67_i32 : i32 to index
    %422 = memref.load %arg2[%421] : memref<100xf32, #tpu.memory_space<smem>>
    %423 = vector.broadcast %422 : f32 to vector<8x128xf32>
    %424 = arith.select %420, %423, %418 : vector<8x128xi1>, vector<8x128xf32>
    %c68_i32 = arith.constant 68 : i32
    %425 = vector.broadcast %c68_i32 : i32 to vector<8x128xi32>
    %426 = arith.cmpi eq, %15, %425 : vector<8x128xi32>
    %427 = arith.index_cast %c68_i32 : i32 to index
    %428 = memref.load %arg2[%427] : memref<100xf32, #tpu.memory_space<smem>>
    %429 = vector.broadcast %428 : f32 to vector<8x128xf32>
    %430 = arith.select %426, %429, %424 : vector<8x128xi1>, vector<8x128xf32>
    %c69_i32 = arith.constant 69 : i32
    %431 = vector.broadcast %c69_i32 : i32 to vector<8x128xi32>
    %432 = arith.cmpi eq, %15, %431 : vector<8x128xi32>
    %433 = arith.index_cast %c69_i32 : i32 to index
    %434 = memref.load %arg2[%433] : memref<100xf32, #tpu.memory_space<smem>>
    %435 = vector.broadcast %434 : f32 to vector<8x128xf32>
    %436 = arith.select %432, %435, %430 : vector<8x128xi1>, vector<8x128xf32>
    %c70_i32 = arith.constant 70 : i32
    %437 = vector.broadcast %c70_i32 : i32 to vector<8x128xi32>
    %438 = arith.cmpi eq, %15, %437 : vector<8x128xi32>
    %439 = arith.index_cast %c70_i32 : i32 to index
    %440 = memref.load %arg2[%439] : memref<100xf32, #tpu.memory_space<smem>>
    %441 = vector.broadcast %440 : f32 to vector<8x128xf32>
    %442 = arith.select %438, %441, %436 : vector<8x128xi1>, vector<8x128xf32>
    %c71_i32 = arith.constant 71 : i32
    %443 = vector.broadcast %c71_i32 : i32 to vector<8x128xi32>
    %444 = arith.cmpi eq, %15, %443 : vector<8x128xi32>
    %445 = arith.index_cast %c71_i32 : i32 to index
    %446 = memref.load %arg2[%445] : memref<100xf32, #tpu.memory_space<smem>>
    %447 = vector.broadcast %446 : f32 to vector<8x128xf32>
    %448 = arith.select %444, %447, %442 : vector<8x128xi1>, vector<8x128xf32>
    %c72_i32 = arith.constant 72 : i32
    %449 = vector.broadcast %c72_i32 : i32 to vector<8x128xi32>
    %450 = arith.cmpi eq, %15, %449 : vector<8x128xi32>
    %451 = arith.index_cast %c72_i32 : i32 to index
    %452 = memref.load %arg2[%451] : memref<100xf32, #tpu.memory_space<smem>>
    %453 = vector.broadcast %452 : f32 to vector<8x128xf32>
    %454 = arith.select %450, %453, %448 : vector<8x128xi1>, vector<8x128xf32>
    %c73_i32 = arith.constant 73 : i32
    %455 = vector.broadcast %c73_i32 : i32 to vector<8x128xi32>
    %456 = arith.cmpi eq, %15, %455 : vector<8x128xi32>
    %457 = arith.index_cast %c73_i32 : i32 to index
    %458 = memref.load %arg2[%457] : memref<100xf32, #tpu.memory_space<smem>>
    %459 = vector.broadcast %458 : f32 to vector<8x128xf32>
    %460 = arith.select %456, %459, %454 : vector<8x128xi1>, vector<8x128xf32>
    %c74_i32 = arith.constant 74 : i32
    %461 = vector.broadcast %c74_i32 : i32 to vector<8x128xi32>
    %462 = arith.cmpi eq, %15, %461 : vector<8x128xi32>
    %463 = arith.index_cast %c74_i32 : i32 to index
    %464 = memref.load %arg2[%463] : memref<100xf32, #tpu.memory_space<smem>>
    %465 = vector.broadcast %464 : f32 to vector<8x128xf32>
    %466 = arith.select %462, %465, %460 : vector<8x128xi1>, vector<8x128xf32>
    %c75_i32 = arith.constant 75 : i32
    %467 = vector.broadcast %c75_i32 : i32 to vector<8x128xi32>
    %468 = arith.cmpi eq, %15, %467 : vector<8x128xi32>
    %469 = arith.index_cast %c75_i32 : i32 to index
    %470 = memref.load %arg2[%469] : memref<100xf32, #tpu.memory_space<smem>>
    %471 = vector.broadcast %470 : f32 to vector<8x128xf32>
    %472 = arith.select %468, %471, %466 : vector<8x128xi1>, vector<8x128xf32>
    %c76_i32 = arith.constant 76 : i32
    %473 = vector.broadcast %c76_i32 : i32 to vector<8x128xi32>
    %474 = arith.cmpi eq, %15, %473 : vector<8x128xi32>
    %475 = arith.index_cast %c76_i32 : i32 to index
    %476 = memref.load %arg2[%475] : memref<100xf32, #tpu.memory_space<smem>>
    %477 = vector.broadcast %476 : f32 to vector<8x128xf32>
    %478 = arith.select %474, %477, %472 : vector<8x128xi1>, vector<8x128xf32>
    %c77_i32 = arith.constant 77 : i32
    %479 = vector.broadcast %c77_i32 : i32 to vector<8x128xi32>
    %480 = arith.cmpi eq, %15, %479 : vector<8x128xi32>
    %481 = arith.index_cast %c77_i32 : i32 to index
    %482 = memref.load %arg2[%481] : memref<100xf32, #tpu.memory_space<smem>>
    %483 = vector.broadcast %482 : f32 to vector<8x128xf32>
    %484 = arith.select %480, %483, %478 : vector<8x128xi1>, vector<8x128xf32>
    %c78_i32 = arith.constant 78 : i32
    %485 = vector.broadcast %c78_i32 : i32 to vector<8x128xi32>
    %486 = arith.cmpi eq, %15, %485 : vector<8x128xi32>
    %487 = arith.index_cast %c78_i32 : i32 to index
    %488 = memref.load %arg2[%487] : memref<100xf32, #tpu.memory_space<smem>>
    %489 = vector.broadcast %488 : f32 to vector<8x128xf32>
    %490 = arith.select %486, %489, %484 : vector<8x128xi1>, vector<8x128xf32>
    %c79_i32 = arith.constant 79 : i32
    %491 = vector.broadcast %c79_i32 : i32 to vector<8x128xi32>
    %492 = arith.cmpi eq, %15, %491 : vector<8x128xi32>
    %493 = arith.index_cast %c79_i32 : i32 to index
    %494 = memref.load %arg2[%493] : memref<100xf32, #tpu.memory_space<smem>>
    %495 = vector.broadcast %494 : f32 to vector<8x128xf32>
    %496 = arith.select %492, %495, %490 : vector<8x128xi1>, vector<8x128xf32>
    %c80_i32 = arith.constant 80 : i32
    %497 = vector.broadcast %c80_i32 : i32 to vector<8x128xi32>
    %498 = arith.cmpi eq, %15, %497 : vector<8x128xi32>
    %499 = arith.index_cast %c80_i32 : i32 to index
    %500 = memref.load %arg2[%499] : memref<100xf32, #tpu.memory_space<smem>>
    %501 = vector.broadcast %500 : f32 to vector<8x128xf32>
    %502 = arith.select %498, %501, %496 : vector<8x128xi1>, vector<8x128xf32>
    %c81_i32 = arith.constant 81 : i32
    %503 = vector.broadcast %c81_i32 : i32 to vector<8x128xi32>
    %504 = arith.cmpi eq, %15, %503 : vector<8x128xi32>
    %505 = arith.index_cast %c81_i32 : i32 to index
    %506 = memref.load %arg2[%505] : memref<100xf32, #tpu.memory_space<smem>>
    %507 = vector.broadcast %506 : f32 to vector<8x128xf32>
    %508 = arith.select %504, %507, %502 : vector<8x128xi1>, vector<8x128xf32>
    %c82_i32 = arith.constant 82 : i32
    %509 = vector.broadcast %c82_i32 : i32 to vector<8x128xi32>
    %510 = arith.cmpi eq, %15, %509 : vector<8x128xi32>
    %511 = arith.index_cast %c82_i32 : i32 to index
    %512 = memref.load %arg2[%511] : memref<100xf32, #tpu.memory_space<smem>>
    %513 = vector.broadcast %512 : f32 to vector<8x128xf32>
    %514 = arith.select %510, %513, %508 : vector<8x128xi1>, vector<8x128xf32>
    %c83_i32 = arith.constant 83 : i32
    %515 = vector.broadcast %c83_i32 : i32 to vector<8x128xi32>
    %516 = arith.cmpi eq, %15, %515 : vector<8x128xi32>
    %517 = arith.index_cast %c83_i32 : i32 to index
    %518 = memref.load %arg2[%517] : memref<100xf32, #tpu.memory_space<smem>>
    %519 = vector.broadcast %518 : f32 to vector<8x128xf32>
    %520 = arith.select %516, %519, %514 : vector<8x128xi1>, vector<8x128xf32>
    %c84_i32 = arith.constant 84 : i32
    %521 = vector.broadcast %c84_i32 : i32 to vector<8x128xi32>
    %522 = arith.cmpi eq, %15, %521 : vector<8x128xi32>
    %523 = arith.index_cast %c84_i32 : i32 to index
    %524 = memref.load %arg2[%523] : memref<100xf32, #tpu.memory_space<smem>>
    %525 = vector.broadcast %524 : f32 to vector<8x128xf32>
    %526 = arith.select %522, %525, %520 : vector<8x128xi1>, vector<8x128xf32>
    %c85_i32 = arith.constant 85 : i32
    %527 = vector.broadcast %c85_i32 : i32 to vector<8x128xi32>
    %528 = arith.cmpi eq, %15, %527 : vector<8x128xi32>
    %529 = arith.index_cast %c85_i32 : i32 to index
    %530 = memref.load %arg2[%529] : memref<100xf32, #tpu.memory_space<smem>>
    %531 = vector.broadcast %530 : f32 to vector<8x128xf32>
    %532 = arith.select %528, %531, %526 : vector<8x128xi1>, vector<8x128xf32>
    %c86_i32 = arith.constant 86 : i32
    %533 = vector.broadcast %c86_i32 : i32 to vector<8x128xi32>
    %534 = arith.cmpi eq, %15, %533 : vector<8x128xi32>
    %535 = arith.index_cast %c86_i32 : i32 to index
    %536 = memref.load %arg2[%535] : memref<100xf32, #tpu.memory_space<smem>>
    %537 = vector.broadcast %536 : f32 to vector<8x128xf32>
    %538 = arith.select %534, %537, %532 : vector<8x128xi1>, vector<8x128xf32>
    %c87_i32 = arith.constant 87 : i32
    %539 = vector.broadcast %c87_i32 : i32 to vector<8x128xi32>
    %540 = arith.cmpi eq, %15, %539 : vector<8x128xi32>
    %541 = arith.index_cast %c87_i32 : i32 to index
    %542 = memref.load %arg2[%541] : memref<100xf32, #tpu.memory_space<smem>>
    %543 = vector.broadcast %542 : f32 to vector<8x128xf32>
    %544 = arith.select %540, %543, %538 : vector<8x128xi1>, vector<8x128xf32>
    %c88_i32 = arith.constant 88 : i32
    %545 = vector.broadcast %c88_i32 : i32 to vector<8x128xi32>
    %546 = arith.cmpi eq, %15, %545 : vector<8x128xi32>
    %547 = arith.index_cast %c88_i32 : i32 to index
    %548 = memref.load %arg2[%547] : memref<100xf32, #tpu.memory_space<smem>>
    %549 = vector.broadcast %548 : f32 to vector<8x128xf32>
    %550 = arith.select %546, %549, %544 : vector<8x128xi1>, vector<8x128xf32>
    %c89_i32 = arith.constant 89 : i32
    %551 = vector.broadcast %c89_i32 : i32 to vector<8x128xi32>
    %552 = arith.cmpi eq, %15, %551 : vector<8x128xi32>
    %553 = arith.index_cast %c89_i32 : i32 to index
    %554 = memref.load %arg2[%553] : memref<100xf32, #tpu.memory_space<smem>>
    %555 = vector.broadcast %554 : f32 to vector<8x128xf32>
    %556 = arith.select %552, %555, %550 : vector<8x128xi1>, vector<8x128xf32>
    %c90_i32 = arith.constant 90 : i32
    %557 = vector.broadcast %c90_i32 : i32 to vector<8x128xi32>
    %558 = arith.cmpi eq, %15, %557 : vector<8x128xi32>
    %559 = arith.index_cast %c90_i32 : i32 to index
    %560 = memref.load %arg2[%559] : memref<100xf32, #tpu.memory_space<smem>>
    %561 = vector.broadcast %560 : f32 to vector<8x128xf32>
    %562 = arith.select %558, %561, %556 : vector<8x128xi1>, vector<8x128xf32>
    %c91_i32 = arith.constant 91 : i32
    %563 = vector.broadcast %c91_i32 : i32 to vector<8x128xi32>
    %564 = arith.cmpi eq, %15, %563 : vector<8x128xi32>
    %565 = arith.index_cast %c91_i32 : i32 to index
    %566 = memref.load %arg2[%565] : memref<100xf32, #tpu.memory_space<smem>>
    %567 = vector.broadcast %566 : f32 to vector<8x128xf32>
    %568 = arith.select %564, %567, %562 : vector<8x128xi1>, vector<8x128xf32>
    %c92_i32 = arith.constant 92 : i32
    %569 = vector.broadcast %c92_i32 : i32 to vector<8x128xi32>
    %570 = arith.cmpi eq, %15, %569 : vector<8x128xi32>
    %571 = arith.index_cast %c92_i32 : i32 to index
    %572 = memref.load %arg2[%571] : memref<100xf32, #tpu.memory_space<smem>>
    %573 = vector.broadcast %572 : f32 to vector<8x128xf32>
    %574 = arith.select %570, %573, %568 : vector<8x128xi1>, vector<8x128xf32>
    %c93_i32 = arith.constant 93 : i32
    %575 = vector.broadcast %c93_i32 : i32 to vector<8x128xi32>
    %576 = arith.cmpi eq, %15, %575 : vector<8x128xi32>
    %577 = arith.index_cast %c93_i32 : i32 to index
    %578 = memref.load %arg2[%577] : memref<100xf32, #tpu.memory_space<smem>>
    %579 = vector.broadcast %578 : f32 to vector<8x128xf32>
    %580 = arith.select %576, %579, %574 : vector<8x128xi1>, vector<8x128xf32>
    %c94_i32 = arith.constant 94 : i32
    %581 = vector.broadcast %c94_i32 : i32 to vector<8x128xi32>
    %582 = arith.cmpi eq, %15, %581 : vector<8x128xi32>
    %583 = arith.index_cast %c94_i32 : i32 to index
    %584 = memref.load %arg2[%583] : memref<100xf32, #tpu.memory_space<smem>>
    %585 = vector.broadcast %584 : f32 to vector<8x128xf32>
    %586 = arith.select %582, %585, %580 : vector<8x128xi1>, vector<8x128xf32>
    %c95_i32 = arith.constant 95 : i32
    %587 = vector.broadcast %c95_i32 : i32 to vector<8x128xi32>
    %588 = arith.cmpi eq, %15, %587 : vector<8x128xi32>
    %589 = arith.index_cast %c95_i32 : i32 to index
    %590 = memref.load %arg2[%589] : memref<100xf32, #tpu.memory_space<smem>>
    %591 = vector.broadcast %590 : f32 to vector<8x128xf32>
    %592 = arith.select %588, %591, %586 : vector<8x128xi1>, vector<8x128xf32>
    %c96_i32 = arith.constant 96 : i32
    %593 = vector.broadcast %c96_i32 : i32 to vector<8x128xi32>
    %594 = arith.cmpi eq, %15, %593 : vector<8x128xi32>
    %595 = arith.index_cast %c96_i32 : i32 to index
    %596 = memref.load %arg2[%595] : memref<100xf32, #tpu.memory_space<smem>>
    %597 = vector.broadcast %596 : f32 to vector<8x128xf32>
    %598 = arith.select %594, %597, %592 : vector<8x128xi1>, vector<8x128xf32>
    %c97_i32 = arith.constant 97 : i32
    %599 = vector.broadcast %c97_i32 : i32 to vector<8x128xi32>
    %600 = arith.cmpi eq, %15, %599 : vector<8x128xi32>
    %601 = arith.index_cast %c97_i32 : i32 to index
    %602 = memref.load %arg2[%601] : memref<100xf32, #tpu.memory_space<smem>>
    %603 = vector.broadcast %602 : f32 to vector<8x128xf32>
    %604 = arith.select %600, %603, %598 : vector<8x128xi1>, vector<8x128xf32>
    %c98_i32 = arith.constant 98 : i32
    %605 = vector.broadcast %c98_i32 : i32 to vector<8x128xi32>
    %606 = arith.cmpi eq, %15, %605 : vector<8x128xi32>
    %607 = arith.index_cast %c98_i32 : i32 to index
    %608 = memref.load %arg2[%607] : memref<100xf32, #tpu.memory_space<smem>>
    %609 = vector.broadcast %608 : f32 to vector<8x128xf32>
    %610 = arith.select %606, %609, %604 : vector<8x128xi1>, vector<8x128xf32>
    %c99_i32_5 = arith.constant 99 : i32
    %611 = vector.broadcast %c99_i32_5 : i32 to vector<8x128xi32>
    %612 = arith.cmpi eq, %15, %611 : vector<8x128xi32>
    %613 = arith.index_cast %c99_i32_5 : i32 to index
    %614 = memref.load %arg2[%613] : memref<100xf32, #tpu.memory_space<smem>>
    %615 = vector.broadcast %614 : f32 to vector<8x128xf32>
    %616 = arith.select %612, %615, %610 : vector<8x128xi1>, vector<8x128xf32>
    %c100_i32 = arith.constant 100 : i32
    %c0_6 = arith.constant 0 : index
    %c0_7 = arith.constant 0 : index
    %617 = vector.load %arg4[%c0_6, %c0_7] : memref<8x128xf32, #tpu.memory_space<vmem>>, vector<8x128xf32>
    tpu.vector_store %arg4[%c0_6, %c0_7], %616 {strides = array<i32>} : memref<8x128xf32, #tpu.memory_space<vmem>>, vector<8x128xf32>,
    return
  }
  func.func @transform_0(%arg0: i32, %arg1: memref<2xf32, #tpu.memory_space<smem>>, %arg2: memref<100xf32, #tpu.memory_space<smem>>) -> (i32, i32) {
    %c0_i32 = arith.constant 0 : i32
    %c0_i32_0 = arith.constant 0 : i32
    return %arg0, %c0_i32 : i32, i32
  }
  func.func @transform_1(%arg0: i32, %arg1: memref<2xf32, #tpu.memory_space<smem>>, %arg2: memref<100xf32, #tpu.memory_space<smem>>) -> (i32, i32) {
    %c0_i32 = arith.constant 0 : i32
    %c0_i32_0 = arith.constant 0 : i32
    return %arg0, %c0_i32 : i32, i32
  }
}

</mosaic_0001>

<llo_original>
// kernel: tpu_custom_call.1
$region0: #{tpu_custom_call.1}
  #allocation0 [shape = 'u32[]', space=smem, size = 0x4, offset = 0x4, fixed_abs, tag = 'smem constant byte address 0x4 - core index']
  #allocation1 [shape = 'u32[144,128]{1,0:T(1,128)}', space=vmem, size = 0x12000, scoped, tag = 'internal scratch']
  #allocation2 [shape = 's32[1]{0}', space=sflag, size = 0x4, scoped, tag = 'scoped memory for tpu_custom_call.1']
  #allocation3 [shape = 'u8[512]{0}', space=smem, size = 0x200, scoped, tag = 'prefetched SMEM operand 0']
  #allocation4 [shape = 'u8[512]{0}', space=smem, size = 0x200, scoped, tag = 'prefetched SMEM operand 1']
  %s0 = inlined_call_operand.hbm [shape: f32[2], index: 0, kind: input, shape index: {}]
  %s1 = inlined_call_operand.vmem [shape: f32[100], index: 1, kind: input, shape index: {}]
  %s2 = inlined_call_operand.hbm [shape: f32[16,128], index: 2, kind: input, shape index: {}]
  %s3 = inlined_call_operand.hbm [shape: f32[16,128], index: 3, kind: output, shape index: {}]
  %s4 = sld [smem:[#allocation0]]
  $region41: #{tpu_custom_call.1} parent=0
    _
  %s6 = ssub.s32 1, %s4
  %s7 = scalar_select 0, %s6, %s4
  %9 = dma.hbm_to_smem %s0, 16, [#allocation3], [#allocation2]
  %s10 = sshll.u32 %s1, 4
  %s11 = int_to_ptr.vmem [resolvable:$true] %s10
  %13 = dma.vmem_to_smem %s11, 16, [#allocation4], [#allocation2]
  %14 = dma.done [#allocation2], 32
  %15 = sfence
  $region1: #{tpu_custom_call.1} parent=0
    #allocation5 [shape = 'u8[8192]{0}', space=vmem, size = 0x2000, scoped, tag = 'input window, operand 2']
    #allocation6 [shape = 's32[2]{0}', space=sflag, size = 0x8, scoped, tag = 'scoped memory for tpu_custom_call.1']
    #allocation7 [shape = 's32[2]{0}', space=sflag, size = 0x8, scoped, tag = 'scoped memory for tpu_custom_call.1']
    #allocation8 [shape = 'u8[8192]{0}', space=vmem, size = 0x2000, scoped, tag = 'output window, operand 0']
    %16 = vsyncpa [#allocation6], 0
    %s17 = scalar_lea.sflag [#allocation6], 1
    %18 = vsyncpa %s17, 0
    %19 = vsyncpa [#allocation7], 0
    %s20 = scalar_lea.sflag [#allocation7], 1
    %21 = vsyncpa %s20, 0
    loop: start=0, step=1, limit=4
    $region2: #{tpu_custom_call.1} parent=1 // loop_pre_header
      _
    $region3: #{tpu_custom_call.1} parent=1 // loop_header
      %s23 = sphi 0, %s27
      %p24 = scmp.ge.s32.totalorder %s23, 4
      %s33 = sphi 0, %s35
      %s36 = sphi 0, %s33
      %s37 = sphi 0, %s36
      %s53 = sphi 0, %s37
      %s59 = sphi 0, %s61
      %s62 = sphi 0, %s59
      %s63 = sphi 0, %s62
      %s79 = sphi 0, %s63
    $region4: #{tpu_custom_call.1} parent=1 // loop_header_branch
      %26 = sbr.rel (%p24) target = $region8
    $region5: #{tpu_custom_call.1} parent=1 // loop_body
      %s28 = ssub.s32 %s23, 1
      %s29 = ssub.s32 %s23, 2
      %s30 = sadd.s32 %s23, 1
      %s31 = ssub.s32 %s23, %s30
      %p32 = scmp.eq.s32.totalorder %s31, 0
      %s34 = sadd.s32 %s33, 1
      %s35 = scalar_select %p32, %s33, %s34
      %p38 = pneg %p32
      %p39 = scmp.eq.s32.totalorder %s23, 1
      %p40 = por %p38, %p39
      %p41 = scmp.ne.s32.totalorder %s33, %s36
      %p42 = scmp.eq.s32.totalorder %s23, 0
      %p43 = por %p41, %p42
      %p44 = scmp.ne.s32.totalorder %s33, %s36
      %p45 = scmp.eq.s32.totalorder %s28, 1
      %p46 = por %p44, %p45
      %p47 = scmp.ne.s32.totalorder %s36, %s37
      %p48 = scmp.eq.s32.totalorder %s28, 0
      %p49 = por %p47, %p48
      %p50 = scmp.ne.s32.totalorder %s36, %s37
      %p51 = scmp.eq.s32.totalorder %s29, 1
      %p52 = por %p50, %p51
      %p54 = scmp.ne.s32.totalorder %s37, %s53
      %p55 = scmp.eq.s32.totalorder %s29, 0
      %p56 = por %p54, %p55
      %s57 = ssub.s32 %s23, %s30
      %p58 = scmp.eq.s32.totalorder %s57, 0
      %s60 = sadd.s32 %s59, 1
      %s61 = scalar_select %p58, %s59, %s60
      %p64 = pneg %p58
      %p65 = scmp.eq.s32.totalorder %s23, 1
      %p66 = por %p64, %p65
      %p67 = scmp.ne.s32.totalorder %s59, %s62
      %p68 = scmp.eq.s32.totalorder %s23, 0
      %p69 = por %p67, %p68
      %p70 = scmp.ne.s32.totalorder %s59, %s62
      %p71 = scmp.eq.s32.totalorder %s28, 1
      %p72 = por %p70, %p71
      %p73 = scmp.ne.s32.totalorder %s62, %s63
      %p74 = scmp.eq.s32.totalorder %s28, 0
      %p75 = por %p73, %p74
      %p76 = scmp.ne.s32.totalorder %s62, %s63
      %p77 = scmp.eq.s32.totalorder %s29, 1
      %p78 = por %p76, %p77
      %p80 = scmp.ne.s32.totalorder %s63, %s79
      %p81 = scmp.eq.s32.totalorder %s29, 0
      %p82 = por %p80, %p81
      %p83 = scmp.le.s32.totalorder 1, %s23
      %p84 = scmp.lt.s32.totalorder %s23, 3
      %p85 = pnand %p83, %p84
      %p86 = pneg %p85
      // Predicated region
      $region9: #{tpu_custom_call.1} parent=5 // pred_check
        _
      $region10: #{tpu_custom_call.1} parent=5 // pred_check_branch
        %88 = sbr.rel (%p85) target = $region12
      $region11: #{tpu_custom_call.1} parent=5 // pred_region
        %s89 = ssub.s32 %s23, 1
      $region12: #{tpu_custom_call.1} parent=5 // pred_fallthru
        _
      %p90 = scmp.lt.s32.totalorder %s23, 2
      // Predicated region
      $region13: #{tpu_custom_call.1} parent=5 // pred_check
        %p91 = pneg %p90
      $region14: #{tpu_custom_call.1} parent=5 // pred_check_branch
        %93 = sbr.rel (%p91) target = $region16
      $region15: #{tpu_custom_call.1} parent=5 // pred_region
        // Predicated region
        $region17: #{tpu_custom_call.1} parent=15 // pred_check
          %p94 = pneg %p43
        $region18: #{tpu_custom_call.1} parent=15 // pred_check_branch
          %96 = sbr.rel (%p94) target = $region20
        $region19: #{tpu_custom_call.1} parent=15 // pred_region
          %s97 = sand.u32 %s33, 1
          %s98 = scalar_lea.sflag [#allocation6], %s97
          %s99 = sand.u32 %s33, 1
          %s100 = smul.addr %s99, 8
          %s101 = scalar_lea.vmem [#allocation5], %s100
          %s103 = ssub.s32 128, 128
          %104 = vsyncadd %s98, %s103
          %s105 = smul.addr %s23, 128
          %s106 = scalar_lea.hbm %s2, %s105
          %s108 = sshll.u32 %s101, 4
          %s109 = int_to_ptr.vmem [resolvable:$true] %s108
          %111 = dma.hbm_to_vmem [thread:$0]  %s106, 128, %s109, %s98
        $region20: #{tpu_custom_call.1} parent=15 // pred_fallthru
          _
      $region16: #{tpu_custom_call.1} parent=5 // pred_fallthru
        _
      %p112 = scmp.le.s32.totalorder 1, %s23
      %p113 = scmp.lt.s32.totalorder %s23, 3
      %p114 = pnand %p112, %p113
      %p115 = pneg %p114
      // Predicated region
      $region21: #{tpu_custom_call.1} parent=5 // pred_check
        _
      $region22: #{tpu_custom_call.1} parent=5 // pred_check_branch
        %117 = sbr.rel (%p114) target = $region24
      $region23: #{tpu_custom_call.1} parent=5 // pred_region
        %s118 = ssub.s32 %s23, 1
        %s119 = sand.u32 %s36, 1
        %s120 = scalar_lea.sflag [#allocation6], %s119
        %s121 = sand.u32 %s36, 1
        %s122 = smul.addr %s121, 8
        %s123 = scalar_lea.vmem [#allocation5], %s122
        // Predicated region
        $region25: #{tpu_custom_call.1} parent=23 // pred_check
          %p124 = pneg %p49
        $region26: #{tpu_custom_call.1} parent=23 // pred_check_branch
          %126 = sbr.rel (%p124) target = $region28
        $region27: #{tpu_custom_call.1} parent=23 // pred_region
          %127 = dma.done %s120, 128
        $region28: #{tpu_custom_call.1} parent=23 // pred_fallthru
          _
        %s128 = sand.u32 %s36, 1
        %s129 = scalar_lea.sflag [#allocation6], %s128
        %s130 = sand.u32 %s36, 1
        %s131 = smul.addr %s130, 8
        %s132 = scalar_lea.vmem [#allocation5], %s131
        %p133 = pneg %p49
        %p134 = pneg %p46
        %p135 = pneg %p75
        %p136 = pneg %p72
        %s137 = sand.u32 %s62, 1
        %s138 = scalar_lea.sflag [#allocation7], %s137
        %s139 = sand.u32 %s62, 1
        %s140 = smul.addr %s139, 8
        %s141 = scalar_lea.vmem [#allocation8], %s140
        %s142 = sld [smem:[#allocation3]]
        %s143 = sld [smem:[#allocation3 + $0x1]]
        %v144 = vld [vmem:[%s123] sm:$0xff]
        %v145 = vstv %s143
        %v146 = vsub.f32 %v144, %v145
        %v147 = vstv %s142
        %v148 = vmul.f32 %v147, %v146
        %v149 = vmax.f32 %v148, 0.0
        %v150 = vmin.f32 %v149, 99.0
        %v151 = vcvt.f32.s32.to.zero.pseudo %v150
        %vm152 = vcmp.gt.s32.totalorder %v151, 0
        %v153 = vsel %vm152, %v151, 0
        %vm154 = vcmp.lt.s32.totalorder %v153, 99
        %v155 = vsel %vm154, %v153, 99
        %vm156 = vcmp.eq.s32.totalorder %v155, 0
        %s157 = sld [smem:[#allocation4]]
        %v158 = vstv %s157
        %v159 = vsel %vm156, %v158, 0.0
        %vm160 = vcmp.eq.s32.totalorder %v155, 1
        %s161 = sld [smem:[#allocation4 + $0x1]]
        %v162 = vstv %s161
        %v163 = vsel %vm160, %v162, %v159
        %vm164 = vcmp.eq.s32.totalorder %v155, 2
        %s165 = sld [smem:[#allocation4 + $0x2]]
        %v166 = vstv %s165
        %v167 = vsel %vm164, %v166, %v163
        %vm168 = vcmp.eq.s32.totalorder %v155, 3
        %s169 = sld [smem:[#allocation4 + $0x3]]
        %v170 = vstv %s169
        %v171 = vsel %vm168, %v170, %v167
        %vm172 = vcmp.eq.s32.totalorder %v155, 4
        %s173 = sld [smem:[#allocation4 + $0x4]]
        %v174 = vstv %s173
        %v175 = vsel %vm172, %v174, %v171
        %vm176 = vcmp.eq.s32.totalorder %v155, 5
        %s177 = sld [smem:[#allocation4 + $0x5]]
        %v178 = vstv %s177
        %v179 = vsel %vm176, %v178, %v175
        %vm180 = vcmp.eq.s32.totalorder %v155, 6
        %s181 = sld [smem:[#allocation4 + $0x6]]
        %v182 = vstv %s181
        %v183 = vsel %vm180, %v182, %v179
        %vm184 = vcmp.eq.s32.totalorder %v155, 7
        %s185 = sld [smem:[#allocation4 + $0x7]]
        %v186 = vstv %s185
        %v187 = vsel %vm184, %v186, %v183
        %vm188 = vcmp.eq.s32.totalorder %v155, 8
        %s189 = sld [smem:[#allocation4 + $0x8]]
        %v190 = vstv %s189
        %v191 = vsel %vm188, %v190, %v187
        %vm192 = vcmp.eq.s32.totalorder %v155, 9
        %s193 = sld [smem:[#allocation4 + $0x9]]
        %v194 = vstv %s193
        %v195 = vsel %vm192, %v194, %v191
        %vm196 = vcmp.eq.s32.totalorder %v155, 10
        %s197 = sld [smem:[#allocation4 + $0xa]]
        %v198 = vstv %s197
        %v199 = vsel %vm196, %v198, %v195
        %vm200 = vcmp.eq.s32.totalorder %v155, 11
        %s201 = sld [smem:[#allocation4 + $0xb]]
        %v202 = vstv %s201
        %v203 = vsel %vm200, %v202, %v199
        %vm204 = vcmp.eq.s32.totalorder %v155, 12
        %s205 = sld [smem:[#allocation4 + $0xc]]
        %v206 = vstv %s205
        %v207 = vsel %vm204, %v206, %v203
        %vm208 = vcmp.eq.s32.totalorder %v155, 13
        %s209 = sld [smem:[#allocation4 + $0xd]]
        %v210 = vstv %s209
        %v211 = vsel %vm208, %v210, %v207
        %vm212 = vcmp.eq.s32.totalorder %v155, 14
        %s213 = sld [smem:[#allocation4 + $0xe]]
        %v214 = vstv %s213
        %v215 = vsel %vm212, %v214, %v211
        %vm216 = vcmp.eq.s32.totalorder %v155, 15
        %s217 = sld [smem:[#allocation4 + $0xf]]
        %v218 = vstv %s217
        %v219 = vsel %vm216, %v218, %v215
        %vm220 = vcmp.eq.s32.totalorder %v155, 16
        %s221 = sld [smem:[#allocation4 + $0x10]]
        %v222 = vstv %s221
        %v223 = vsel %vm220, %v222, %v219
        %vm224 = vcmp.eq.s32.totalorder %v155, 17
        %s225 = sld [smem:[#allocation4 + $0x11]]
        %v226 = vstv %s225
        %v227 = vsel %vm224, %v226, %v223
        %vm228 = vcmp.eq.s32.totalorder %v155, 18
        %s229 = sld [smem:[#allocation4 + $0x12]]
        %v230 = vstv %s229
        %v231 = vsel %vm228, %v230, %v227
        %vm232 = vcmp.eq.s32.totalorder %v155, 19
        %s233 = sld [smem:[#allocation4 + $0x13]]
        %v234 = vstv %s233
        %v235 = vsel %vm232, %v234, %v231
        %vm236 = vcmp.eq.s32.totalorder %v155, 20
        %s237 = sld [smem:[#allocation4 + $0x14]]
        %v238 = vstv %s237
        %v239 = vsel %vm236, %v238, %v235
        %vm240 = vcmp.eq.s32.totalorder %v155, 21
        %s241 = sld [smem:[#allocation4 + $0x15]]
        %v242 = vstv %s241
        %v243 = vsel %vm240, %v242, %v239
        %vm244 = vcmp.eq.s32.totalorder %v155, 22
        %s245 = sld [smem:[#allocation4 + $0x16]]
        %v246 = vstv %s245
        %v247 = vsel %vm244, %v246, %v243
        %vm248 = vcmp.eq.s32.totalorder %v155, 23
        %s249 = sld [smem:[#allocation4 + $0x17]]
        %v250 = vstv %s249
        %v251 = vsel %vm248, %v250, %v247
        %vm252 = vcmp.eq.s32.totalorder %v155, 24
        %s253 = sld [smem:[#allocation4 + $0x18]]
        %v254 = vstv %s253
        %v255 = vsel %vm252, %v254, %v251
        %vm256 = vcmp.eq.s32.totalorder %v155, 25
        %s257 = sld [smem:[#allocation4 + $0x19]]
        %v258 = vstv %s257
        %v259 = vsel %vm256, %v258, %v255
        %vm260 = vcmp.eq.s32.totalorder %v155, 26
        %s261 = sld [smem:[#allocation4 + $0x1a]]
        %v262 = vstv %s261
        %v263 = vsel %vm260, %v262, %v259
        %vm264 = vcmp.eq.s32.totalorder %v155, 27
        %s265 = sld [smem:[#allocation4 + $0x1b]]
        %v266 = vstv %s265
        %v267 = vsel %vm264, %v266, %v263
        %vm268 = vcmp.eq.s32.totalorder %v155, 28
        %s269 = sld [smem:[#allocation4 + $0x1c]]
        %v270 = vstv %s269
        %v271 = vsel %vm268, %v270, %v267
        %vm272 = vcmp.eq.s32.totalorder %v155, 29
        %s273 = sld [smem:[#allocation4 + $0x1d]]
        %v274 = vstv %s273
        %v275 = vsel %vm272, %v274, %v271
        %vm276 = vcmp.eq.s32.totalorder %v155, 30
        %s277 = sld [smem:[#allocation4 + $0x1e]]
        %v278 = vstv %s277
        %v279 = vsel %vm276, %v278, %v275
        %vm280 = vcmp.eq.s32.totalorder %v155, 31
        %s281 = sld [smem:[#allocation4 + $0x1f]]
        %v282 = vstv %s281
        %v283 = vsel %vm280, %v282, %v279
        %vm284 = vcmp.eq.s32.totalorder %v155, 32
        %s285 = sld [smem:[#allocation4 + $0x20]]
        %v286 = vstv %s285
        %v287 = vsel %vm284, %v286, %v283
        %vm288 = vcmp.eq.s32.totalorder %v155, 33
        %s289 = sld [smem:[#allocation4 + $0x21]]
        %v290 = vstv %s289
        %v291 = vsel %vm288, %v290, %v287
        %vm292 = vcmp.eq.s32.totalorder %v155, 34
        %s293 = sld [smem:[#allocation4 + $0x22]]
        %v294 = vstv %s293
        %v295 = vsel %vm292, %v294, %v291
        %vm296 = vcmp.eq.s32.totalorder %v155, 35
        %s297 = sld [smem:[#allocation4 + $0x23]]
        %v298 = vstv %s297
        %v299 = vsel %vm296, %v298, %v295
        %vm300 = vcmp.eq.s32.totalorder %v155, 36
        %s301 = sld [smem:[#allocation4 + $0x24]]
        %v302 = vstv %s301
        %v303 = vsel %vm300, %v302, %v299
        %vm304 = vcmp.eq.s32.totalorder %v155, 37
        %s305 = sld [smem:[#allocation4 + $0x25]]
        %v306 = vstv %s305
        %v307 = vsel %vm304, %v306, %v303
        %vm308 = vcmp.eq.s32.totalorder %v155, 38
        %s309 = sld [smem:[#allocation4 + $0x26]]
        %v310 = vstv %s309
        %v311 = vsel %vm308, %v310, %v307
        %vm312 = vcmp.eq.s32.totalorder %v155, 39
        %s313 = sld [smem:[#allocation4 + $0x27]]
        %v314 = vstv %s313
        %v315 = vsel %vm312, %v314, %v311
        %vm316 = vcmp.eq.s32.totalorder %v155, 40
        %s317 = sld [smem:[#allocation4 + $0x28]]
        %v318 = vstv %s317
        %v319 = vsel %vm316, %v318, %v315
        %vm320 = vcmp.eq.s32.totalorder %v155, 41
        %s321 = sld [smem:[#allocation4 + $0x29]]
        %v322 = vstv %s321
        %v323 = vsel %vm320, %v322, %v319
        %vm324 = vcmp.eq.s32.totalorder %v155, 42
        %s325 = sld [smem:[#allocation4 + $0x2a]]
        %v326 = vstv %s325
        %v327 = vsel %vm324, %v326, %v323
        %vm328 = vcmp.eq.s32.totalorder %v155, 43
        %s329 = sld [smem:[#allocation4 + $0x2b]]
        %v330 = vstv %s329
        %v331 = vsel %vm328, %v330, %v327
        %vm332 = vcmp.eq.s32.totalorder %v155, 44
        %s333 = sld [smem:[#allocation4 + $0x2c]]
        %v334 = vstv %s333
        %v335 = vsel %vm332, %v334, %v331
        %vm336 = vcmp.eq.s32.totalorder %v155, 45
        %s337 = sld [smem:[#allocation4 + $0x2d]]
        %v338 = vstv %s337
        %v339 = vsel %vm336, %v338, %v335
        %vm340 = vcmp.eq.s32.totalorder %v155, 46
        %s341 = sld [smem:[#allocation4 + $0x2e]]
        %v342 = vstv %s341
        %v343 = vsel %vm340, %v342, %v339
        %vm344 = vcmp.eq.s32.totalorder %v155, 47
        %s345 = sld [smem:[#allocation4 + $0x2f]]
        %v346 = vstv %s345
        %v347 = vsel %vm344, %v346, %v343
        %vm348 = vcmp.eq.s32.totalorder %v155, 48
        %s349 = sld [smem:[#allocation4 + $0x30]]
        %v350 = vstv %s349
        %v351 = vsel %vm348, %v350, %v347
        %vm352 = vcmp.eq.s32.totalorder %v155, 49
        %s353 = sld [smem:[#allocation4 + $0x31]]
        %v354 = vstv %s353
        %v355 = vsel %vm352, %v354, %v351
        %vm356 = vcmp.eq.s32.totalorder %v155, 50
        %s357 = sld [smem:[#allocation4 + $0x32]]
        %v358 = vstv %s357
        %v359 = vsel %vm356, %v358, %v355
        %vm360 = vcmp.eq.s32.totalorder %v155, 51
        %s361 = sld [smem:[#allocation4 + $0x33]]
        %v362 = vstv %s361
        %v363 = vsel %vm360, %v362, %v359
        %vm364 = vcmp.eq.s32.totalorder %v155, 52
        %s365 = sld [smem:[#allocation4 + $0x34]]
        %v366 = vstv %s365
        %v367 = vsel %vm364, %v366, %v363
        %vm368 = vcmp.eq.s32.totalorder %v155, 53
        %s369 = sld [smem:[#allocation4 + $0x35]]
        %v370 = vstv %s369
        %v371 = vsel %vm368, %v370, %v367
        %vm372 = vcmp.eq.s32.totalorder %v155, 54
        %s373 = sld [smem:[#allocation4 + $0x36]]
        %v374 = vstv %s373
        %v375 = vsel %vm372, %v374, %v371
        %vm376 = vcmp.eq.s32.totalorder %v155, 55
        %s377 = sld [smem:[#allocation4 + $0x37]]
        %v378 = vstv %s377
        %v379 = vsel %vm376, %v378, %v375
        %vm380 = vcmp.eq.s32.totalorder %v155, 56
        %s381 = sld [smem:[#allocation4 + $0x38]]
        %v382 = vstv %s381
        %v383 = vsel %vm380, %v382, %v379
        %vm384 = vcmp.eq.s32.totalorder %v155, 57
        %s385 = sld [smem:[#allocation4 + $0x39]]
        %v386 = vstv %s385
        %v387 = vsel %vm384, %v386, %v383
        %vm388 = vcmp.eq.s32.totalorder %v155, 58
        %s389 = sld [smem:[#allocation4 + $0x3a]]
        %v390 = vstv %s389
        %v391 = vsel %vm388, %v390, %v387
        %vm392 = vcmp.eq.s32.totalorder %v155, 59
        %s393 = sld [smem:[#allocation4 + $0x3b]]
        %v394 = vstv %s393
        %v395 = vsel %vm392, %v394, %v391
        %vm396 = vcmp.eq.s32.totalorder %v155, 60
        %s397 = sld [smem:[#allocation4 + $0x3c]]
        %v398 = vstv %s397
        %v399 = vsel %vm396, %v398, %v395
        %vm400 = vcmp.eq.s32.totalorder %v155, 61
        %s401 = sld [smem:[#allocation4 + $0x3d]]
        %v402 = vstv %s401
        %v403 = vsel %vm400, %v402, %v399
        %vm404 = vcmp.eq.s32.totalorder %v155, 62
        %s405 = sld [smem:[#allocation4 + $0x3e]]
        %v406 = vstv %s405
        %v407 = vsel %vm404, %v406, %v403
        %vm408 = vcmp.eq.s32.totalorder %v155, 63
        %s409 = sld [smem:[#allocation4 + $0x3f]]
        %v410 = vstv %s409
        %v411 = vsel %vm408, %v410, %v407
        %vm412 = vcmp.eq.s32.totalorder %v155, 64
        %s413 = sld [smem:[#allocation4 + $0x40]]
        %v414 = vstv %s413
        %v415 = vsel %vm412, %v414, %v411
        %vm416 = vcmp.eq.s32.totalorder %v155, 65
        %s417 = sld [smem:[#allocation4 + $0x41]]
        %v418 = vstv %s417
        %v419 = vsel %vm416, %v418, %v415
        %vm420 = vcmp.eq.s32.totalorder %v155, 66
        %s421 = sld [smem:[#allocation4 + $0x42]]
        %v422 = vstv %s421
        %v423 = vsel %vm420, %v422, %v419
        %vm424 = vcmp.eq.s32.totalorder %v155, 67
        %s425 = sld [smem:[#allocation4 + $0x43]]
        %v426 = vstv %s425
        %v427 = vsel %vm424, %v426, %v423
        %vm428 = vcmp.eq.s32.totalorder %v155, 68
        %s429 = sld [smem:[#allocation4 + $0x44]]
        %v430 = vstv %s429
        %v431 = vsel %vm428, %v430, %v427
        %vm432 = vcmp.eq.s32.totalorder %v155, 69
        %s433 = sld [smem:[#allocation4 + $0x45]]
        %v434 = vstv %s433
        %v435 = vsel %vm432, %v434, %v431
        %vm436 = vcmp.eq.s32.totalorder %v155, 70
        %s437 = sld [smem:[#allocation4 + $0x46]]
        %v438 = vstv %s437
        %v439 = vsel %vm436, %v438, %v435
        %vm440 = vcmp.eq.s32.totalorder %v155, 71
        %s441 = sld [smem:[#allocation4 + $0x47]]
        %v442 = vstv %s441
        %v443 = vsel %vm440, %v442, %v439
        %vm444 = vcmp.eq.s32.totalorder %v155, 72
        %s445 = sld [smem:[#allocation4 + $0x48]]
        %v446 = vstv %s445
        %v447 = vsel %vm444, %v446, %v443
        %vm448 = vcmp.eq.s32.totalorder %v155, 73
        %s449 = sld [smem:[#allocation4 + $0x49]]
        %v450 = vstv %s449
        %v451 = vsel %vm448, %v450, %v447
        %vm452 = vcmp.eq.s32.totalorder %v155, 74
        %s453 = sld [smem:[#allocation4 + $0x4a]]
        %v454 = vstv %s453
        %v455 = vsel %vm452, %v454, %v451
        %vm456 = vcmp.eq.s32.totalorder %v155, 75
        %s457 = sld [smem:[#allocation4 + $0x4b]]
        %v458 = vstv %s457
        %v459 = vsel %vm456, %v458, %v455
        %vm460 = vcmp.eq.s32.totalorder %v155, 76
        %s461 = sld [smem:[#allocation4 + $0x4c]]
        %v462 = vstv %s461
        %v463 = vsel %vm460, %v462, %v459
        %vm464 = vcmp.eq.s32.totalorder %v155, 77
        %s465 = sld [smem:[#allocation4 + $0x4d]]
        %v466 = vstv %s465
        %v467 = vsel %vm464, %v466, %v463
        %vm468 = vcmp.eq.s32.totalorder %v155, 78
        %s469 = sld [smem:[#allocation4 + $0x4e]]
        %v470 = vstv %s469
        %v471 = vsel %vm468, %v470, %v467
        %vm472 = vcmp.eq.s32.totalorder %v155, 79
        %s473 = sld [smem:[#allocation4 + $0x4f]]
        %v474 = vstv %s473
        %v475 = vsel %vm472, %v474, %v471
        %vm476 = vcmp.eq.s32.totalorder %v155, 80
        %s477 = sld [smem:[#allocation4 + $0x50]]
        %v478 = vstv %s477
        %v479 = vsel %vm476, %v478, %v475
        %vm480 = vcmp.eq.s32.totalorder %v155, 81
        %s481 = sld [smem:[#allocation4 + $0x51]]
        %v482 = vstv %s481
        %v483 = vsel %vm480, %v482, %v479
        %vm484 = vcmp.eq.s32.totalorder %v155, 82
        %s485 = sld [smem:[#allocation4 + $0x52]]
        %v486 = vstv %s485
        %v487 = vsel %vm484, %v486, %v483
        %vm488 = vcmp.eq.s32.totalorder %v155, 83
        %s489 = sld [smem:[#allocation4 + $0x53]]
        %v490 = vstv %s489
        %v491 = vsel %vm488, %v490, %v487
        %vm492 = vcmp.eq.s32.totalorder %v155, 84
        %s493 = sld [smem:[#allocation4 + $0x54]]
        %v494 = vstv %s493
        %v495 = vsel %vm492, %v494, %v491
        %vm496 = vcmp.eq.s32.totalorder %v155, 85
        %s497 = sld [smem:[#allocation4 + $0x55]]
        %v498 = vstv %s497
        %v499 = vsel %vm496, %v498, %v495
        %vm500 = vcmp.eq.s32.totalorder %v155, 86
        %s501 = sld [smem:[#allocation4 + $0x56]]
        %v502 = vstv %s501
        %v503 = vsel %vm500, %v502, %v499
        %vm504 = vcmp.eq.s32.totalorder %v155, 87
        %s505 = sld [smem:[#allocation4 + $0x57]]
        %v506 = vstv %s505
        %v507 = vsel %vm504, %v506, %v503
        %vm508 = vcmp.eq.s32.totalorder %v155, 88
        %s509 = sld [smem:[#allocation4 + $0x58]]
        %v510 = vstv %s509
        %v511 = vsel %vm508, %v510, %v507
        %vm512 = vcmp.eq.s32.totalorder %v155, 89
        %s513 = sld [smem:[#allocation4 + $0x59]]
        %v514 = vstv %s513
        %v515 = vsel %vm512, %v514, %v511
        %vm516 = vcmp.eq.s32.totalorder %v155, 90
        %s517 = sld [smem:[#allocation4 + $0x5a]]
        %v518 = vstv %s517
        %v519 = vsel %vm516, %v518, %v515
        %vm520 = vcmp.eq.s32.totalorder %v155, 91
        %s521 = sld [smem:[#allocation4 + $0x5b]]
        %v522 = vstv %s521
        %v523 = vsel %vm520, %v522, %v519
        %vm524 = vcmp.eq.s32.totalorder %v155, 92
        %s525 = sld [smem:[#allocation4 + $0x5c]]
        %v526 = vstv %s525
        %v527 = vsel %vm524, %v526, %v523
        %vm528 = vcmp.eq.s32.totalorder %v155, 93
        %s529 = sld [smem:[#allocation4 + $0x5d]]
        %v530 = vstv %s529
        %v531 = vsel %vm528, %v530, %v527
        %vm532 = vcmp.eq.s32.totalorder %v155, 94
        %s533 = sld [smem:[#allocation4 + $0x5e]]
        %v534 = vstv %s533
        %v535 = vsel %vm532, %v534, %v531
        %vm536 = vcmp.eq.s32.totalorder %v155, 95
        %s537 = sld [smem:[#allocation4 + $0x5f]]
        %v538 = vstv %s537
        %v539 = vsel %vm536, %v538, %v535
        %vm540 = vcmp.eq.s32.totalorder %v155, 96
        %s541 = sld [smem:[#allocation4 + $0x60]]
        %v542 = vstv %s541
        %v543 = vsel %vm540, %v542, %v539
        %vm544 = vcmp.eq.s32.totalorder %v155, 97
        %s545 = sld [smem:[#allocation4 + $0x61]]
        %v546 = vstv %s545
        %v547 = vsel %vm544, %v546, %v543
        %vm548 = vcmp.eq.s32.totalorder %v155, 98
        %s549 = sld [smem:[#allocation4 + $0x62]]
        %v550 = vstv %s549
        %v551 = vsel %vm548, %v550, %v547
        %vm552 = vcmp.eq.s32.totalorder %v155, 99
        %s553 = sld [smem:[#allocation4 + $0x63]]
        %v554 = vstv %s553
        %v555 = vsel %vm552, %v554, %v551
        %556 = vst [vmem:[%s141] sm:$0xff] %v555
        %s557 = sand.u32 %s62, 1
        %s558 = scalar_lea.sflag [#allocation7], %s557
        %s559 = sand.u32 %s62, 1
        %s560 = smul.addr %s559, 8
        %s561 = scalar_lea.vmem [#allocation8], %s560
        // Predicated region
        $region29: #{tpu_custom_call.1} parent=23 // pred_check
          %p562 = pneg %p72
        $region30: #{tpu_custom_call.1} parent=23 // pred_check_branch
          %564 = sbr.rel (%p562) target = $region32
        $region31: #{tpu_custom_call.1} parent=23 // pred_region
          %s566 = ssub.s32 128, 128
          %567 = vsyncadd %s558, %s566
          %s568 = smul.addr %s28, 128
          %s569 = scalar_lea.hbm %s3, %s568
          %s571 = sshll.u32 %s561, 4
          %s572 = int_to_ptr.vmem [resolvable:$true] %s571
          %574 = dma.vmem_to_hbm [thread:$0]  %s572, 128, %s569, %s558
        $region32: #{tpu_custom_call.1} parent=23 // pred_fallthru
          _
      $region24: #{tpu_custom_call.1} parent=5 // pred_fallthru
        _
      %p575 = scmp.le.s32.totalorder 2, %s23
      // Predicated region
      $region33: #{tpu_custom_call.1} parent=5 // pred_check
        %p576 = pneg %p575
      $region34: #{tpu_custom_call.1} parent=5 // pred_check_branch
        %578 = sbr.rel (%p576) target = $region36
      $region35: #{tpu_custom_call.1} parent=5 // pred_region
        %s579 = ssub.s32 %s23, 2
        // Predicated region
        $region37: #{tpu_custom_call.1} parent=35 // pred_check
          %p580 = pneg %p78
        $region38: #{tpu_custom_call.1} parent=35 // pred_check_branch
          %582 = sbr.rel (%p580) target = $region40
        $region39: #{tpu_custom_call.1} parent=35 // pred_region
          %s583 = sand.u32 %s63, 1
          %s584 = scalar_lea.sflag [#allocation7], %s583
          %s585 = sand.u32 %s63, 1
          %s586 = smul.addr %s585, 8
          %s587 = scalar_lea.vmem [#allocation8], %s586
          %588 = dma.done %s584, 128
        $region40: #{tpu_custom_call.1} parent=35 // pred_fallthru
          _
      $region36: #{tpu_custom_call.1} parent=5 // pred_fallthru
        _
    $region6: #{tpu_custom_call.1} parent=1 // loop_footer
      %s27 = sadd.s32 1, %s23
    $region7: #{tpu_custom_call.1} parent=1 // loop_footer_branch
      %22 = sbr.rel target = $region3
    $region8: #{tpu_custom_call.1} parent=1 // loop_exit
      _
    %589 = vsyncpa [#allocation6], 1
    %s590 = scalar_lea.sflag [#allocation6], 1
    %591 = vsyncpa %s590, 1
    %592 = vsyncpa [#allocation7], 1
    %s593 = scalar_lea.sflag [#allocation7], 1
    %594 = vsyncpa %s593, 1

</llo_original>
